<compile_context>
chip_gen: v7x
topology: tpu7x:2x2x1
jax: 0.10.0
libtpu: 0.0.40
codegen_flags: <defaults>
</compile_context>

<pallas_src>
import functools

import jax
import jax.numpy as jnp
import numpy as np
from jax.experimental import pallas as pl
from jax.experimental.pallas import tpu as pltpu


# ------------------------------------------------------------------ kernel ---
def ncf_kernel(
    gmf_u_ref, gmf_i_ref, mlp_u_ref, mlp_i_ref,            # (tb, D) bf16 tiles
    w1u_ref, w1i_ref, c1_ref, w2_ref, c2_ref, w3_ref, c3_ref,  # BN-folded MLP
    hg_ref, hm_ref, bp_ref,                                 # head slabs + bias
    out_ref,                                                # (1, tb) f32
):
    f32 = jnp.float32

    # --- GMF branch: wp_g is folded into the user embedding at prep time, so
    # the head contribution is just a row-sum of this product (MXU, below).
    gmf = gmf_u_ref[...].astype(f32) * gmf_i_ref[...].astype(f32)        # (tb, Dg)

    # --- MLP stack: BatchNorm(eval) folded into W / c; dropout = identity.
    # Layer 1 consumes the user/item streams directly (split W1, no concat).
    h = (jnp.dot(mlp_u_ref[...].astype(f32), w1u_ref[...],
                 preferred_element_type=f32)
         + jnp.dot(mlp_i_ref[...].astype(f32), w1i_ref[...],
                   preferred_element_type=f32))
    h = jnp.maximum(h + c1_ref[...], 0.0)

    h = jnp.dot(h, w2_ref[...], preferred_element_type=f32)
    h = jnp.maximum(h + c2_ref[...], 0.0)

    h = jnp.dot(h, w3_ref[...], preferred_element_type=f32)
    h = jnp.maximum(h + c3_ref[...], 0.0)                                # (tb, h3)

    # --- prediction head, produced lane-dense (batch on lanes):
    #   out[0, b] = sum_d gmf[b, d] + sum_d h[b, d] * wp_m[d] + bp
    # Both reductions are A @ B^T matmuls (NT dimension numbers, idle MXU);
    # rows 1..7 of the weight slabs are zero so only row 0 carries the result.
    nt = (((1,), (1,)), ((), ()))
    head = (jax.lax.dot_general(hg_ref[...], gmf, nt, preferred_element_type=f32)
            + jax.lax.dot_general(hm_ref[...], h, nt, preferred_element_type=f32))
    out_ref[...] = (head[0:1, :] + bp_ref[...]).astype(out_ref.dtype)


# --------------------------------------------------------------- wrapper -----
def _round_up(x, m):
    return (x + m - 1) // m * m


def prepare_params(params, emb_dtype=jnp.bfloat16):
    """One-time parameter prep (model-load time, NOT per forward call):
      * fold eval-mode BatchNorm into each Linear:  W' = W*s,  c' = b*s + t
      * split W1 so the kernel consumes the user/item MLP streams directly
      * fold wp_g into the GMF user embedding (head term becomes a row-sum)
      * build 8-row head slabs (row 0 live) for the lane-dense A @ B^T head
      * embeddings stored bf16; MLP weights stay f32 (VMEM-resident)."""
    eps = 1e-5

    def fold(w, b, gamma, beta, mean, var):
        scale = gamma / jnp.sqrt(var + eps)
        shift = beta - mean * scale
        return ((w * scale[None, :]).astype(jnp.float32),          # W' = W * s
                (b * scale + shift).astype(jnp.float32)[None, :])  # c' = b*s + t

    w1, c1 = fold(params["w1"], params["b1"], params["bn1_gamma"],
                  params["bn1_beta"], params["bn1_mean"], params["bn1_var"])
    w2, c2 = fold(params["w2"], params["b2"], params["bn2_gamma"],
                  params["bn2_beta"], params["bn2_mean"], params["bn2_var"])
    w3, c3 = fold(params["w3"], params["b3"], params["bn3_gamma"],
                  params["bn3_beta"], params["bn3_mean"], params["bn3_var"])

    d_gmf = params["gmf_user_emb"].shape[1]
    d_mlp = params["mlp_user_emb"].shape[1]
    h3 = w3.shape[1]

    wp = params["wp"].astype(jnp.float32)        # (d_gmf + h3, 1)
    wp_g = wp[:d_gmf, 0]                         # (d_gmf,)
    wp_m = wp[d_gmf:, 0]                         # (h3,)

    head_g = jnp.zeros((8, d_gmf), jnp.float32).at[0].set(1.0)
    head_m = jnp.zeros((8, h3), jnp.float32).at[0].set(wp_m)

    return {
        # wp_g folded into the GMF user embedding.
        "gmf_user_emb": (params["gmf_user_emb"] * wp_g[None, :]).astype(emb_dtype),
        "gmf_item_emb": params["gmf_item_emb"].astype(emb_dtype),
        "mlp_user_emb": params["mlp_user_emb"].astype(emb_dtype),
        "mlp_item_emb": params["mlp_item_emb"].astype(emb_dtype),
        "w1_u": w1[:d_mlp], "w1_i": w1[d_mlp:], "c1": c1,
        "w2": w2, "c2": c2, "w3": w3, "c3": c3,
        "head_g": head_g, "head_m": head_m,
        "bp": params["bp"].reshape(1, 1).astype(jnp.float32),
    }


@functools.partial(jax.jit, static_argnames=("block_batch",))
def ncf_forward(prep, user_indices, item_indices, *, block_batch=2048):
    batch = user_indices.shape[0]

    # Batch tile: multiple of 128 (lane-dense output blocks + bf16 packing).
    # Guarantee >= 2 tiles when the batch is big enough (v7x megacore).
    rounded = max(128, _round_up(batch, 128))
    tb = min(block_batch, rounded)
    if tb == rounded and rounded >= 256:
        tb = _round_up(rounded // 2, 128)
    padded = _round_up(batch, tb)
    num_tiles = padded // tb

    if padded != batch:
        pad = padded - batch
        user_indices = jnp.pad(user_indices, (0, pad))   # index 0 is valid
        item_indices = jnp.pad(item_indices, (0, pad))

    # Embedding gathers stay in XLA (bf16 rows halve the HBM traffic).
    gmf_u = jnp.take(prep["gmf_user_emb"], user_indices, axis=0)
    gmf_i = jnp.take(prep["gmf_item_emb"], item_indices, axis=0)
    mlp_u = jnp.take(prep["mlp_user_emb"], user_indices, axis=0)
    mlp_i = jnp.take(prep["mlp_item_emb"], item_indices, axis=0)

    d_gmf = gmf_u.shape[1]
    d_mlp = mlp_u.shape[1]
    h1 = prep["w1_u"].shape[1]
    h2 = prep["w2"].shape[1]
    h3 = prep["w3"].shape[1]

    weights = (prep["w1_u"], prep["w1_i"], prep["c1"], prep["w2"], prep["c2"],
               prep["w3"], prep["c3"], prep["head_g"], prep["head_m"], prep["bp"])

    act_spec = lambda d: pl.BlockSpec((tb, d), lambda i: (i, 0))
    res_spec = lambda a: pl.BlockSpec(a.shape, lambda i: (0, 0))   # VMEM resident

    weight_bytes = sum(int(w.size) * w.dtype.itemsize for w in weights)
    bytes_accessed = padded * (2 * d_gmf * 2 + 2 * d_mlp * 2 + 4) + weight_bytes
    flops = 2 * padded * (2 * d_mlp * h1 + h1 * h2 + h2 * h3 + 8 * (d_gmf + h3))

    out = pl.pallas_call(
        ncf_kernel,
        out_shape=jax.ShapeDtypeStruct((num_tiles, 1, tb), jnp.float32),
        grid=(num_tiles,),
        in_specs=[
            act_spec(d_gmf), act_spec(d_gmf), act_spec(d_mlp), act_spec(d_mlp),
            *[res_spec(w) for w in weights],
        ],
        out_specs=pl.BlockSpec((None, 1, tb), lambda i: (i, 0, 0)),
        compiler_params=pltpu.CompilerParams(
            dimension_semantics=("parallel",),            # megacore on v7x
            vmem_limit_bytes=32 * 1024 * 1024),           # safe on v7x's 64 MiB
        cost_estimate=pl.CostEstimate(
            flops=int(flops), transcendentals=0,
            bytes_accessed=int(bytes_accessed)),
    )(gmf_u, gmf_i, mlp_u, mlp_i, *weights)

    return out.reshape(padded, 1)[:batch]


# -------------------------------------------------------- parameter init -----
def init_params(key, num_users, num_items, gmf_dim, mlp_dim, hidden):
    ks = jax.random.split(key, 16)
    h1, h2, h3 = hidden
    p = {
        # embeddings: normal(std=0.01) as in the PyTorch module
        "gmf_user_emb": 0.01 * jax.random.normal(ks[0], (num_users, gmf_dim), jnp.float32),
        "gmf_item_emb": 0.01 * jax.random.normal(ks[1], (num_items, gmf_dim), jnp.float32),
        "mlp_user_emb": 0.01 * jax.random.normal(ks[2], (num_users, mlp_dim), jnp.float32),
        "mlp_item_emb": 0.01 * jax.random.normal(ks[3], (num_items, mlp_dim), jnp.float32),
        # MLP linears (stored as [in, out])
        "w1": 0.1 * jax.random.normal(ks[4], (2 * mlp_dim, h1), jnp.float32),
        "b1": 0.1 * jax.random.normal(ks[5], (h1,), jnp.float32),
        "w2": 0.1 * jax.random.normal(ks[6], (h1, h2), jnp.float32),
        "b2": 0.1 * jax.random.normal(ks[7], (h2,), jnp.float32),
        "w3": 0.1 * jax.random.normal(ks[8], (h2, h3), jnp.float32),
        "b3": 0.1 * jax.random.normal(ks[9], (h3,), jnp.float32),
        # prediction head over concat([gmf, mlp_out])
        "wp": 0.1 * jax.random.normal(ks[10], (gmf_dim + h3, 1), jnp.float32),
        "bp": 0.1 * jax.random.normal(ks[11], (1,), jnp.float32),
    }
    # BatchNorm params / running stats (PyTorch init values)
    for i, h in zip((1, 2, 3), (h1, h2, h3)):
        p[f"bn{i}_gamma"] = jnp.ones((h,), jnp.float32)
        p[f"bn{i}_beta"] = jnp.zeros((h,), jnp.float32)
        p[f"bn{i}_mean"] = jnp.zeros((h,), jnp.float32)
        p[f"bn{i}_var"] = jnp.ones((h,), jnp.float32)
    return p


# ------------------------------------------------------- pure-JAX references -
def ncf_reference(params, user_indices, item_indices):
    """Full-precision reference matching the PyTorch module in eval mode."""
    gmf = (jnp.take(params["gmf_user_emb"], user_indices, axis=0)
           * jnp.take(params["gmf_item_emb"], item_indices, axis=0))
    x = jnp.concatenate(
        [jnp.take(params["mlp_user_emb"], user_indices, axis=0),
         jnp.take(params["mlp_item_emb"], item_indices, axis=0)], axis=1)
    eps = 1e-5
    for i, (w, b) in enumerate(
        [(params["w1"], params["b1"]), (params["w2"], params["b2"]),
         (params["w3"], params["b3"])], start=1):
        x = x @ w + b
        g, be = params[f"bn{i}_gamma"], params[f"bn{i}_beta"]
        m, v = params[f"bn{i}_mean"], params[f"bn{i}_var"]
        x = g * (x - m) / jnp.sqrt(v + eps) + be
        x = jnp.maximum(x, 0.0)
        # dropout omitted (eval-mode identity)
    z = jnp.concatenate([gmf, x], axis=1)
    return z @ params["wp"] + params["bp"]


def ncf_reference_prepared(prep, user_indices, item_indices):
    """Reference on the exact (BN-folded, bf16-rounded) operands the kernel sees,
    computed in f32 — isolates kernel-internal error from quantization error."""
    f32 = lambda a: a.astype(jnp.float32)
    gmf = (f32(jnp.take(prep["gmf_user_emb"], user_indices, axis=0))
           * f32(jnp.take(prep["gmf_item_emb"], item_indices, axis=0)))
    mu = f32(jnp.take(prep["mlp_user_emb"], user_indices, axis=0))
    mi = f32(jnp.take(prep["mlp_item_emb"], item_indices, axis=0))
    x = jnp.maximum(mu @ prep["w1_u"] + mi @ prep["w1_i"] + prep["c1"], 0.0)
    x = jnp.maximum(x @ prep["w2"] + prep["c2"], 0.0)
    x = jnp.maximum(x @ prep["w3"] + prep["c3"], 0.0)
    wp_m = prep["head_m"][0]                       # (h3,)
    return (jnp.sum(gmf, axis=-1, keepdims=True)
            + x @ wp_m[:, None] + prep["bp"])


# -------------------------------------------------------------------- main ---
if __name__ == "__main__":
    num_users, num_items = 50, 100
    gmf_dim, mlp_dim = 32, 32
    hidden = (64, 32, 16)

    key = jax.random.PRNGKey(0)
    pkey, ukey, ikey = jax.random.split(key, 3)
    params = init_params(pkey, num_users, num_items, gmf_dim, mlp_dim, hidden)
    prep = prepare_params(params)          # one-time: fold BN + wp_g, split W1

    def run_case(batch, block_batch):
        uk = jax.random.fold_in(ukey, batch)
        ik = jax.random.fold_in(ikey, batch)
        u = jax.random.randint(uk, (batch,), 0, num_users, dtype=jnp.int32)
        it = jax.random.randint(ik, (batch,), 0, num_items, dtype=jnp.int32)

        out = jax.block_until_ready(
            ncf_forward(prep, u, it, block_batch=block_batch))

        # Tight check vs. the exact (folded, bf16-rounded) operands the kernel saw.
        ref_p = ncf_reference_prepared(prep, u, it)
        np.testing.assert_allclose(np.asarray(out), np.asarray(ref_p),
                                   rtol=5e-3, atol=1e-4)
        # Semantic check vs. the full-precision PyTorch-equivalent forward.
        ref_f = ncf_reference(params, u, it)
        np.testing.assert_allclose(np.asarray(out), np.asarray(ref_f),
                                   rtol=5e-2, atol=2e-2)

    run_case(batch=24, block_batch=2048)    # single 128-row tile
    run_case(batch=260, block_batch=2048)   # tile-split path -> 2 tiles (megacore)
    run_case(batch=300, block_batch=128)    # 3 tiles, exercises the grid loop

    print("KERNEL_OK")
</pallas_src>

<mosaic_0001>
module attributes {stable_mosaic.version = 11 : i64} {
  func.func @ncf_kernel(%arg0: i32, %arg1: memref<128x32xbf16, #tpu.memory_space<vmem>>, %arg2: memref<128x32xbf16, #tpu.memory_space<vmem>>, %arg3: memref<128x32xbf16, #tpu.memory_space<vmem>>, %arg4: memref<128x32xbf16, #tpu.memory_space<vmem>>, %arg5: memref<32x64xf32, #tpu.memory_space<vmem>>, %arg6: memref<32x64xf32, #tpu.memory_space<vmem>>, %arg7: memref<1x64xf32, #tpu.memory_space<vmem>>, %arg8: memref<64x32xf32, #tpu.memory_space<vmem>>, %arg9: memref<1x32xf32, #tpu.memory_space<vmem>>, %arg10: memref<32x16xf32, #tpu.memory_space<vmem>>, %arg11: memref<1x16xf32, #tpu.memory_space<vmem>>, %arg12: memref<8x32xf32, #tpu.memory_space<vmem>>, %arg13: memref<8x16xf32, #tpu.memory_space<vmem>>, %arg14: memref<1x1xf32, #tpu.memory_space<vmem>>, %arg15: memref<1x1x128xf32, #tpu.memory_space<vmem>>) attributes {dimension_semantics = [#tpu.dimension_semantics<parallel>], iteration_bounds = array<i64: 1>, scalar_prefetch = 0 : i64, scratch_operands = 0 : i64, tpu.core_type = #tpu.core_type<tc>, window_params = [{transform_indices = @transform_0, window_bounds = array<i64: 128, 32>}, {transform_indices = @transform_1, window_bounds = array<i64: 128, 32>}, {transform_indices = @transform_2, window_bounds = array<i64: 128, 32>}, {transform_indices = @transform_3, window_bounds = array<i64: 128, 32>}, {pipeline_mode = #tpu.pipeline_mode<synchronous>, transform_indices = @transform_4, window_bounds = array<i64: 32, 64>}, {pipeline_mode = #tpu.pipeline_mode<synchronous>, transform_indices = @transform_5, window_bounds = array<i64: 32, 64>}, {pipeline_mode = #tpu.pipeline_mode<synchronous>, transform_indices = @transform_6, window_bounds = array<i64: 1, 64>}, {pipeline_mode = #tpu.pipeline_mode<synchronous>, transform_indices = @transform_7, window_bounds = array<i64: 64, 32>}, {pipeline_mode = #tpu.pipeline_mode<synchronous>, transform_indices = @transform_8, window_bounds = array<i64: 1, 32>}, {pipeline_mode = #tpu.pipeline_mode<synchronous>, transform_indices = @transform_9, window_bounds = array<i64: 32, 16>}, {pipeline_mode = #tpu.pipeline_mode<synchronous>, transform_indices = @transform_10, window_bounds = array<i64: 1, 16>}, {pipeline_mode = #tpu.pipeline_mode<synchronous>, transform_indices = @transform_11, window_bounds = array<i64: 8, 32>}, {pipeline_mode = #tpu.pipeline_mode<synchronous>, transform_indices = @transform_12, window_bounds = array<i64: 8, 16>}, {pipeline_mode = #tpu.pipeline_mode<synchronous>, transform_indices = @transform_13, window_bounds = array<i64: 1, 1>}, {transform_indices = @transform_14, window_bounds = array<i64: 1, 1, 128>}]} {
    %c0 = arith.constant 0 : index
    %c0_0 = arith.constant 0 : index
    %0 = vector.load %arg1[%c0, %c0_0] : memref<128x32xbf16, #tpu.memory_space<vmem>>, vector<128x32xbf16>
    %1 = arith.extf %0 : vector<128x32xbf16> to vector<128x32xf32>
    %c0_1 = arith.constant 0 : index
    %c0_2 = arith.constant 0 : index
    %2 = vector.load %arg2[%c0_1, %c0_2] : memref<128x32xbf16, #tpu.memory_space<vmem>>, vector<128x32xbf16>
    %3 = arith.extf %2 : vector<128x32xbf16> to vector<128x32xf32>
    %4 = arith.mulf %1, %3 : vector<128x32xf32>
    %c0_3 = arith.constant 0 : index
    %c0_4 = arith.constant 0 : index
    %5 = vector.load %arg3[%c0_3, %c0_4] : memref<128x32xbf16, #tpu.memory_space<vmem>>, vector<128x32xbf16>
    %6 = arith.extf %5 : vector<128x32xbf16> to vector<128x32xf32>
    %c0_5 = arith.constant 0 : index
    %c0_6 = arith.constant 0 : index
    %7 = vector.load %arg5[%c0_5, %c0_6] : memref<32x64xf32, #tpu.memory_space<vmem>>, vector<32x64xf32>
    %cst = arith.constant dense<0.000000e+00> : vector<128x64xf32>
    %8 = tpu.matmul %6, %7, %cst {dimension_numbers = #tpu.dot_dimension_numbers<[1], [0], [0], [1], [0, 0, 1, 1], [], []>} : vector<128x32xf32>, vector<32x64xf32>, vector<128x64xf32> -> vector<128x64xf32>
    %c0_7 = arith.constant 0 : index
    %c0_8 = arith.constant 0 : index
    %9 = vector.load %arg4[%c0_7, %c0_8] : memref<128x32xbf16, #tpu.memory_space<vmem>>, vector<128x32xbf16>
    %10 = arith.extf %9 : vector<128x32xbf16> to vector<128x32xf32>
    %c0_9 = arith.constant 0 : index
    %c0_10 = arith.constant 0 : index
    %11 = vector.load %arg6[%c0_9, %c0_10] : memref<32x64xf32, #tpu.memory_space<vmem>>, vector<32x64xf32>
    %cst_11 = arith.constant dense<0.000000e+00> : vector<128x64xf32>
    %12 = tpu.matmul %10, %11, %cst_11 {dimension_numbers = #tpu.dot_dimension_numbers<[1], [0], [0], [1], [0, 0, 1, 1], [], []>} : vector<128x32xf32>, vector<32x64xf32>, vector<128x64xf32> -> vector<128x64xf32>
    %13 = arith.addf %8, %12 : vector<128x64xf32>
    %c0_12 = arith.constant 0 : index
    %c0_13 = arith.constant 0 : index
    %14 = vector.load %arg7[%c0_12, %c0_13] : memref<1x64xf32, #tpu.memory_space<vmem>>, vector<1x64xf32>
    %15 = vector.broadcast %14 : vector<1x64xf32> to vector<128x64xf32>
    %16 = arith.addf %13, %15 : vector<128x64xf32>
    %cst_14 = arith.constant 0.000000e+00 : f32
    %17 = vector.broadcast %cst_14 : f32 to vector<128x64xf32>
    %18 = arith.maximumf %16, %17 : vector<128x64xf32>
    %c0_15 = arith.constant 0 : index
    %c0_16 = arith.constant 0 : index
    %19 = vector.load %arg8[%c0_15, %c0_16] : memref<64x32xf32, #tpu.memory_space<vmem>>, vector<64x32xf32>
    %cst_17 = arith.constant dense<0.000000e+00> : vector<128x32xf32>
    %20 = tpu.matmul %18, %19, %cst_17 {dimension_numbers = #tpu.dot_dimension_numbers<[1], [0], [0], [1], [0, 0, 1, 1], [], []>} : vector<128x64xf32>, vector<64x32xf32>, vector<128x32xf32> -> vector<128x32xf32>
    %c0_18 = arith.constant 0 : index
    %c0_19 = arith.constant 0 : index
    %21 = vector.load %arg9[%c0_18, %c0_19] : memref<1x32xf32, #tpu.memory_space<vmem>>, vector<1x32xf32>
    %22 = vector.broadcast %21 : vector<1x32xf32> to vector<128x32xf32>
    %23 = arith.addf %20, %22 : vector<128x32xf32>
    %cst_20 = arith.constant 0.000000e+00 : f32
    %24 = vector.broadcast %cst_20 : f32 to vector<128x32xf32>
    %25 = arith.maximumf %23, %24 : vector<128x32xf32>
    %c0_21 = arith.constant 0 : index
    %c0_22 = arith.constant 0 : index
    %26 = vector.load %arg10[%c0_21, %c0_22] : memref<32x16xf32, #tpu.memory_space<vmem>>, vector<32x16xf32>
    %cst_23 = arith.constant dense<0.000000e+00> : vector<128x16xf32>
    %27 = tpu.matmul %25, %26, %cst_23 {dimension_numbers = #tpu.dot_dimension_numbers<[1], [0], [0], [1], [0, 0, 1, 1], [], []>} : vector<128x32xf32>, vector<32x16xf32>, vector<128x16xf32> -> vector<128x16xf32>
    %c0_24 = arith.constant 0 : index
    %c0_25 = arith.constant 0 : index
    %28 = vector.load %arg11[%c0_24, %c0_25] : memref<1x16xf32, #tpu.memory_space<vmem>>, vector<1x16xf32>
    %29 = vector.broadcast %28 : vector<1x16xf32> to vector<128x16xf32>
    %30 = arith.addf %27, %29 : vector<128x16xf32>
    %cst_26 = arith.constant 0.000000e+00 : f32
    %31 = vector.broadcast %cst_26 : f32 to vector<128x16xf32>
    %32 = arith.maximumf %30, %31 : vector<128x16xf32>
    %c0_27 = arith.constant 0 : index
    %c0_28 = arith.constant 0 : index
    %33 = vector.load %arg12[%c0_27, %c0_28] : memref<8x32xf32, #tpu.memory_space<vmem>>, vector<8x32xf32>
    %cst_29 = arith.constant dense<0.000000e+00> : vector<8x128xf32>
    %34 = tpu.matmul %33, %4, %cst_29 {dimension_numbers = #tpu.dot_dimension_numbers<[1], [1], [0], [0], [0, 0, 1, 0], [], []>} : vector<8x32xf32>, vector<128x32xf32>, vector<8x128xf32> -> vector<8x128xf32>
    %c0_30 = arith.constant 0 : index
    %c0_31 = arith.constant 0 : index
    %35 = vector.load %arg13[%c0_30, %c0_31] : memref<8x16xf32, #tpu.memory_space<vmem>>, vector<8x16xf32>
    %cst_32 = arith.constant dense<0.000000e+00> : vector<8x128xf32>
    %36 = tpu.matmul %35, %32, %cst_32 {dimension_numbers = #tpu.dot_dimension_numbers<[1], [1], [0], [0], [0, 0, 1, 0], [], []>} : vector<8x16xf32>, vector<128x16xf32>, vector<8x128xf32> -> vector<8x128xf32>
    %37 = arith.addf %34, %36 : vector<8x128xf32>
    %38 = vector.extract_strided_slice %37 {offsets = [0, 0], sizes = [1, 128], strides = [1, 1]} : vector<8x128xf32> to vector<1x128xf32>
    %c0_33 = arith.constant 0 : index
    %c0_34 = arith.constant 0 : index
    %39 = vector.load %arg14[%c0_33, %c0_34] : memref<1x1xf32, #tpu.memory_space<vmem>>, vector<1x1xf32>
    %40 = vector.broadcast %39 : vector<1x1xf32> to vector<1x128xf32>
    %41 = arith.addf %38, %40 : vector<1x128xf32>
    %c0_35 = arith.constant 0 : index
    %c0_36 = arith.constant 0 : index
    %c0_37 = arith.constant 0 : index
    %42 = vector.load %arg15[%c0_35, %c0_36, %c0_37] : memref<1x1x128xf32, #tpu.memory_space<vmem>>, vector<1x1x128xf32>
    %43 = vector.shape_cast %42 : vector<1x1x128xf32> to vector<1x128xf32>
    %44 = vector.shape_cast %41 : vector<1x128xf32> to vector<1x1x128xf32>
    tpu.vector_store %arg15[%c0_35, %c0_36, %c0_37], %44 {strides = array<i32>} : memref<1x1x128xf32, #tpu.memory_space<vmem>>, vector<1x1x128xf32>,
    return
  }
  func.func @transform_0(%arg0: i32) -> (i32, i32) {
    %c0_i32 = arith.constant 0 : i32
    %c0_i32_0 = arith.constant 0 : i32
    return %arg0, %c0_i32 : i32, i32
  }
  func.func @transform_1(%arg0: i32) -> (i32, i32) {
    %c0_i32 = arith.constant 0 : i32
    %c0_i32_0 = arith.constant 0 : i32
    return %arg0, %c0_i32 : i32, i32
  }
  func.func @transform_2(%arg0: i32) -> (i32, i32) {
    %c0_i32 = arith.constant 0 : i32
    %c0_i32_0 = arith.constant 0 : i32
    return %arg0, %c0_i32 : i32, i32
  }
  func.func @transform_3(%arg0: i32) -> (i32, i32) {
    %c0_i32 = arith.constant 0 : i32
    %c0_i32_0 = arith.constant 0 : i32
    return %arg0, %c0_i32 : i32, i32
  }
  func.func @transform_4(%arg0: i32) -> (i32, i32) {
    %c0_i32 = arith.constant 0 : i32
    %c0_i32_0 = arith.constant 0 : i32
    %c0_i32_1 = arith.constant 0 : i32
    return %c0_i32, %c0_i32_0 : i32, i32
  }
  func.func @transform_5(%arg0: i32) -> (i32, i32) {
    %c0_i32 = arith.constant 0 : i32
    %c0_i32_0 = arith.constant 0 : i32
    %c0_i32_1 = arith.constant 0 : i32
    return %c0_i32, %c0_i32_0 : i32, i32
  }
  func.func @transform_6(%arg0: i32) -> (i32, i32) {
    %c0_i32 = arith.constant 0 : i32
    %c0_i32_0 = arith.constant 0 : i32
    %c0_i32_1 = arith.constant 0 : i32
    return %c0_i32, %c0_i32_0 : i32, i32
  }
  func.func @transform_7(%arg0: i32) -> (i32, i32) {
    %c0_i32 = arith.constant 0 : i32
    %c0_i32_0 = arith.constant 0 : i32
    %c0_i32_1 = arith.constant 0 : i32
    return %c0_i32, %c0_i32_0 : i32, i32
  }
  func.func @transform_8(%arg0: i32) -> (i32, i32) {
    %c0_i32 = arith.constant 0 : i32
    %c0_i32_0 = arith.constant 0 : i32
    %c0_i32_1 = arith.constant 0 : i32
    return %c0_i32, %c0_i32_0 : i32, i32
  }
  func.func @transform_9(%arg0: i32) -> (i32, i32) {
    %c0_i32 = arith.constant 0 : i32
    %c0_i32_0 = arith.constant 0 : i32
    %c0_i32_1 = arith.constant 0 : i32
    return %c0_i32, %c0_i32_0 : i32, i32
  }
  func.func @transform_10(%arg0: i32) -> (i32, i32) {
    %c0_i32 = arith.constant 0 : i32
    %c0_i32_0 = arith.constant 0 : i32
    %c0_i32_1 = arith.constant 0 : i32
    return %c0_i32, %c0_i32_0 : i32, i32
  }
  func.func @transform_11(%arg0: i32) -> (i32, i32) {
    %c0_i32 = arith.constant 0 : i32
    %c0_i32_0 = arith.constant 0 : i32
    %c0_i32_1 = arith.constant 0 : i32
    return %c0_i32, %c0_i32_0 : i32, i32
  }
  func.func @transform_12(%arg0: i32) -> (i32, i32) {
    %c0_i32 = arith.constant 0 : i32
    %c0_i32_0 = arith.constant 0 : i32
    %c0_i32_1 = arith.constant 0 : i32
    return %c0_i32, %c0_i32_0 : i32, i32
  }
  func.func @transform_13(%arg0: i32) -> (i32, i32) {
    %c0_i32 = arith.constant 0 : i32
    %c0_i32_0 = arith.constant 0 : i32
    %c0_i32_1 = arith.constant 0 : i32
    return %c0_i32, %c0_i32_0 : i32, i32
  }
  func.func @transform_14(%arg0: i32) -> (i32, i32, i32) {
    %c0_i32 = arith.constant 0 : i32
    %c0_i32_0 = arith.constant 0 : i32
    %c0_i32_1 = arith.constant 0 : i32
    return %arg0, %c0_i32, %c0_i32_0 : i32, i32, i32
  }
}

</mosaic_0001>

<llo_original>
// kernel: ncf_forward.1
$region0: #{ncf_forward.1}
  #allocation0 [shape = 'u32[]', space=smem, size = 0x4, offset = 0x4, fixed_abs, tag = 'smem constant byte address 0x4 - core index']
  #allocation1 [shape = 'u32[144,128]{1,0:T(1,128)}', space=vmem, size = 0x12000, scoped, tag = 'internal scratch']
  #allocation2 [shape = 'f32[1,1]{1,0:T(1,128)S(1)}', space=vmem, size = 0x200, scoped, tag = 'scoped memory for ncf_forward.1']
  %s0 = inlined_call_operand.vmem [shape: bf16[128,32], index: 0, kind: input, shape index: {}]
  %s1 = inlined_call_operand.vmem [shape: bf16[128,32], index: 1, kind: input, shape index: {}]
  %s2 = inlined_call_operand.vmem [shape: bf16[128,32], index: 2, kind: input, shape index: {}]
  %s3 = inlined_call_operand.vmem [shape: bf16[128,32], index: 3, kind: input, shape index: {}]
  %s4 = inlined_call_operand.vmem [shape: f32[32,64], index: 4, kind: input, shape index: {}]
  %s5 = inlined_call_operand.vmem [shape: f32[32,64], index: 5, kind: input, shape index: {}]
  %s6 = inlined_call_operand.vmem [shape: f32[1,64], index: 6, kind: input, shape index: {}]
  %s7 = inlined_call_operand.vmem [shape: f32[64,32], index: 7, kind: input, shape index: {}]
  %s8 = inlined_call_operand.vmem [shape: f32[1,32], index: 8, kind: input, shape index: {}]
  %s9 = inlined_call_operand.vmem [shape: f32[32,16], index: 9, kind: input, shape index: {}]
  %s10 = inlined_call_operand.vmem [shape: f32[1,16], index: 10, kind: input, shape index: {}]
  %s11 = inlined_call_operand.vmem [shape: f32[8,32], index: 11, kind: input, shape index: {}]
  %s12 = inlined_call_operand.vmem [shape: f32[8,16], index: 12, kind: input, shape index: {}]
  %s13 = inlined_call_operand.<no memory space> [shape: f32[1,1], index: 13, kind: input, shape index: {}]
  %s14 = inlined_call_operand.vmem [shape: f32[1,1,128], index: 14, kind: output, shape index: {}]
  %s15 = sld [smem:[#allocation0]]
  $region66: #{ncf_forward.1} parent=0
    _
  %s17 = ssub.s32 1, %s15
  %s18 = scalar_select 0, %s17, %s15
  %v19 = vstv %s13
  %20 = vst [vmem:[#allocation2] sm:$0x1] %v19
  // Predicated region
  $region2: #{ncf_forward.1} parent=0 // pred_check
    _
  $region3: #{ncf_forward.1} parent=0 // pred_check_branch
    %22 = sbr.rel (0) target = $region5
  $region4: #{ncf_forward.1} parent=0 // pred_region
    _
  $region5: #{ncf_forward.1} parent=0 // pred_fallthru
    _
  // Predicated region
  $region6: #{ncf_forward.1} parent=0 // pred_check
    _
  $region7: #{ncf_forward.1} parent=0 // pred_check_branch
    %24 = sbr.rel (0) target = $region9
  $region8: #{ncf_forward.1} parent=0 // pred_region
    _
  $region9: #{ncf_forward.1} parent=0 // pred_fallthru
    _
  // Predicated region
  $region10: #{ncf_forward.1} parent=0 // pred_check
    _
  $region11: #{ncf_forward.1} parent=0 // pred_check_branch
    %26 = sbr.rel (0) target = $region13
  $region12: #{ncf_forward.1} parent=0 // pred_region
    _
  $region13: #{ncf_forward.1} parent=0 // pred_fallthru
    _
  // Predicated region
  $region14: #{ncf_forward.1} parent=0 // pred_check
    _
  $region15: #{ncf_forward.1} parent=0 // pred_check_branch
    %28 = sbr.rel (0) target = $region17
  $region16: #{ncf_forward.1} parent=0 // pred_region
    _
  $region17: #{ncf_forward.1} parent=0 // pred_fallthru
    _
  // Predicated region
  $region18: #{ncf_forward.1} parent=0 // pred_check
    _
  $region19: #{ncf_forward.1} parent=0 // pred_check_branch
    %30 = sbr.rel (0) target = $region21
  $region20: #{ncf_forward.1} parent=0 // pred_region
    _
  $region21: #{ncf_forward.1} parent=0 // pred_fallthru
    _
  // Predicated region
  $region22: #{ncf_forward.1} parent=0 // pred_check
    _
  $region23: #{ncf_forward.1} parent=0 // pred_check_branch
    %32 = sbr.rel (0) target = $region25
  $region24: #{ncf_forward.1} parent=0 // pred_region
    _
  $region25: #{ncf_forward.1} parent=0 // pred_fallthru
    _
  // Predicated region
  $region26: #{ncf_forward.1} parent=0 // pred_check
    _
  $region27: #{ncf_forward.1} parent=0 // pred_check_branch
    %34 = sbr.rel (0) target = $region29
  $region28: #{ncf_forward.1} parent=0 // pred_region
    _
  $region29: #{ncf_forward.1} parent=0 // pred_fallthru
    _
  // Predicated region
  $region30: #{ncf_forward.1} parent=0 // pred_check
    _
  $region31: #{ncf_forward.1} parent=0 // pred_check_branch
    %36 = sbr.rel (0) target = $region33
  $region32: #{ncf_forward.1} parent=0 // pred_region
    _
  $region33: #{ncf_forward.1} parent=0 // pred_fallthru
    _
  // Predicated region
  $region34: #{ncf_forward.1} parent=0 // pred_check
    _
  $region35: #{ncf_forward.1} parent=0 // pred_check_branch
    %38 = sbr.rel (0) target = $region37
  $region36: #{ncf_forward.1} parent=0 // pred_region
    _
  $region37: #{ncf_forward.1} parent=0 // pred_fallthru
    _
  // Predicated region
  $region38: #{ncf_forward.1} parent=0 // pred_check
    _
  $region39: #{ncf_forward.1} parent=0 // pred_check_branch
    %40 = sbr.rel (0) target = $region41
  $region40: #{ncf_forward.1} parent=0 // pred_region
    _
  $region41: #{ncf_forward.1} parent=0 // pred_fallthru
    _
  // Predicated region
  $region42: #{ncf_forward.1} parent=0 // pred_check
    _
  $region43: #{ncf_forward.1} parent=0 // pred_check_branch
    %42 = sbr.rel (0) target = $region45
  $region44: #{ncf_forward.1} parent=0 // pred_region
    _
  $region45: #{ncf_forward.1} parent=0 // pred_fallthru
    _
  // Predicated region
  $region46: #{ncf_forward.1} parent=0 // pred_check
    _
  $region47: #{ncf_forward.1} parent=0 // pred_check_branch
    %44 = sbr.rel (0) target = $region49
  $region48: #{ncf_forward.1} parent=0 // pred_region
    _
  $region49: #{ncf_forward.1} parent=0 // pred_fallthru
    _
  // Predicated region
  $region50: #{ncf_forward.1} parent=0 // pred_check
    _
  $region51: #{ncf_forward.1} parent=0 // pred_check_branch
    %46 = sbr.rel (0) target = $region53
  $region52: #{ncf_forward.1} parent=0 // pred_region
    _
  $region53: #{ncf_forward.1} parent=0 // pred_fallthru
    _
  // Predicated region
  $region54: #{ncf_forward.1} parent=0 // pred_check
    _
  $region55: #{ncf_forward.1} parent=0 // pred_check_branch
    %48 = sbr.rel (0) target = $region57
  $region56: #{ncf_forward.1} parent=0 // pred_region
    _
  $region57: #{ncf_forward.1} parent=0 // pred_fallthru
    _
  %v49 = vld [vmem:[%s0] sm:$0xf]
  %v50 = vld [vmem:[%s0 + $0x4] sm:$0xf]
  %v51 = vld [vmem:[%s0 + $0x8] sm:$0xf]
  %v52 = vld [vmem:[%s0 + $0xc] sm:$0xf]
  %v53 = vld [vmem:[%s0 + $0x10] sm:$0xf]
  %v54 = vld [vmem:[%s0 + $0x14] sm:$0xf]
  %v55 = vld [vmem:[%s0 + $0x18] sm:$0xf]
  %v56 = vld [vmem:[%s0 + $0x1c] sm:$0xf]
  %v57 = vld [vmem:[%s0 + $0x20] sm:$0xf]
  %v58 = vld [vmem:[%s0 + $0x24] sm:$0xf]
  %v59 = vld [vmem:[%s0 + $0x28] sm:$0xf]
  %v60 = vld [vmem:[%s0 + $0x2c] sm:$0xf]
  %v61 = vld [vmem:[%s0 + $0x30] sm:$0xf]
  %v62 = vld [vmem:[%s0 + $0x34] sm:$0xf]
  %v63 = vld [vmem:[%s0 + $0x38] sm:$0xf]
  %v64 = vld [vmem:[%s0 + $0x3c] sm:$0xf]
  %v65 = vunpack.c.l.bf16 %v49
  %v66 = vunpack.c.l.bf16 %v50
  %v67 = vunpack.c.l.bf16 %v51
  %v68 = vunpack.c.l.bf16 %v52
  %v69 = vunpack.c.l.bf16 %v53
  %v70 = vunpack.c.l.bf16 %v54
  %v71 = vunpack.c.l.bf16 %v55
  %v72 = vunpack.c.l.bf16 %v56
  %v73 = vunpack.c.l.bf16 %v57
  %v74 = vunpack.c.l.bf16 %v58
  %v75 = vunpack.c.l.bf16 %v59
  %v76 = vunpack.c.l.bf16 %v60
  %v77 = vunpack.c.l.bf16 %v61
  %v78 = vunpack.c.l.bf16 %v62
  %v79 = vunpack.c.l.bf16 %v63
  %v80 = vunpack.c.l.bf16 %v64
  %v81 = vld [vmem:[%s1] sm:$0xf]
  %v82 = vld [vmem:[%s1 + $0x4] sm:$0xf]
  %v83 = vld [vmem:[%s1 + $0x8] sm:$0xf]
  %v84 = vld [vmem:[%s1 + $0xc] sm:$0xf]
  %v85 = vld [vmem:[%s1 + $0x10] sm:$0xf]
  %v86 = vld [vmem:[%s1 + $0x14] sm:$0xf]
  %v87 = vld [vmem:[%s1 + $0x18] sm:$0xf]
  %v88 = vld [vmem:[%s1 + $0x1c] sm:$0xf]
  %v89 = vld [vmem:[%s1 + $0x20] sm:$0xf]
  %v90 = vld [vmem:[%s1 + $0x24] sm:$0xf]
  %v91 = vld [vmem:[%s1 + $0x28] sm:$0xf]
  %v92 = vld [vmem:[%s1 + $0x2c] sm:$0xf]
  %v93 = vld [vmem:[%s1 + $0x30] sm:$0xf]
  %v94 = vld [vmem:[%s1 + $0x34] sm:$0xf]
  %v95 = vld [vmem:[%s1 + $0x38] sm:$0xf]
  %v96 = vld [vmem:[%s1 + $0x3c] sm:$0xf]
  %v97 = vunpack.c.l.bf16 %v81
  %v98 = vunpack.c.l.bf16 %v82
  %v99 = vunpack.c.l.bf16 %v83
  %v100 = vunpack.c.l.bf16 %v84
  %v101 = vunpack.c.l.bf16 %v85
  %v102 = vunpack.c.l.bf16 %v86
  %v103 = vunpack.c.l.bf16 %v87
  %v104 = vunpack.c.l.bf16 %v88
  %v105 = vunpack.c.l.bf16 %v89
  %v106 = vunpack.c.l.bf16 %v90
  %v107 = vunpack.c.l.bf16 %v91
  %v108 = vunpack.c.l.bf16 %v92
  %v109 = vunpack.c.l.bf16 %v93
  %v110 = vunpack.c.l.bf16 %v94
  %v111 = vunpack.c.l.bf16 %v95
  %v112 = vunpack.c.l.bf16 %v96
  %v113 = vmul.f32 %v65, %v97
  %v114 = vmul.f32 %v66, %v98
  %v115 = vmul.f32 %v67, %v99
  %v116 = vmul.f32 %v68, %v100
  %v117 = vmul.f32 %v69, %v101
  %v118 = vmul.f32 %v70, %v102
  %v119 = vmul.f32 %v71, %v103
  %v120 = vmul.f32 %v72, %v104
  %v121 = vmul.f32 %v73, %v105
  %v122 = vmul.f32 %v74, %v106
  %v123 = vmul.f32 %v75, %v107
  %v124 = vmul.f32 %v76, %v108
  %v125 = vmul.f32 %v77, %v109
  %v126 = vmul.f32 %v78, %v110
  %v127 = vmul.f32 %v79, %v111
  %v128 = vmul.f32 %v80, %v112
  %v129 = vld [vmem:[%s2] sm:$0xf]
  %v130 = vld [vmem:[%s2 + $0x4] sm:$0xf]
  %v131 = vld [vmem:[%s2 + $0x8] sm:$0xf]
  %v132 = vld [vmem:[%s2 + $0xc] sm:$0xf]
  %v133 = vld [vmem:[%s2 + $0x10] sm:$0xf]
  %v134 = vld [vmem:[%s2 + $0x14] sm:$0xf]
  %v135 = vld [vmem:[%s2 + $0x18] sm:$0xf]
  %v136 = vld [vmem:[%s2 + $0x1c] sm:$0xf]
  %v137 = vld [vmem:[%s2 + $0x20] sm:$0xf]
  %v138 = vld [vmem:[%s2 + $0x24] sm:$0xf]
  %v139 = vld [vmem:[%s2 + $0x28] sm:$0xf]
  %v140 = vld [vmem:[%s2 + $0x2c] sm:$0xf]
  %v141 = vld [vmem:[%s2 + $0x30] sm:$0xf]
  %v142 = vld [vmem:[%s2 + $0x34] sm:$0xf]
  %v143 = vld [vmem:[%s2 + $0x38] sm:$0xf]
  %v144 = vld [vmem:[%s2 + $0x3c] sm:$0xf]
  %v145 = vunpack.c.l.bf16 %v129
  %v146 = vunpack.c.l.bf16 %v130
  %v147 = vunpack.c.l.bf16 %v131
  %v148 = vunpack.c.l.bf16 %v132
  %v149 = vunpack.c.l.bf16 %v133
  %v150 = vunpack.c.l.bf16 %v134
  %v151 = vunpack.c.l.bf16 %v135
  %v152 = vunpack.c.l.bf16 %v136
  %v153 = vunpack.c.l.bf16 %v137
  %v154 = vunpack.c.l.bf16 %v138
  %v155 = vunpack.c.l.bf16 %v139
  %v156 = vunpack.c.l.bf16 %v140
  %v157 = vunpack.c.l.bf16 %v141
  %v158 = vunpack.c.l.bf16 %v142
  %v159 = vunpack.c.l.bf16 %v143
  %v160 = vunpack.c.l.bf16 %v144
  %v161 = vld [vmem:[%s4] sm:$0xff]
  %v162 = vld [vmem:[%s4 + $0x8] sm:$0xff]
  %v163 = vld [vmem:[%s4 + $0x10] sm:$0xff]
  %v164 = vld [vmem:[%s4 + $0x18] sm:$0xff]
  %v165 = vld [vmem:[%s3] sm:$0xf]
  %v166 = vld [vmem:[%s3 + $0x4] sm:$0xf]
  %v167 = vld [vmem:[%s3 + $0x8] sm:$0xf]
  %v168 = vld [vmem:[%s3 + $0xc] sm:$0xf]
  %v169 = vld [vmem:[%s3 + $0x10] sm:$0xf]
  %v170 = vld [vmem:[%s3 + $0x14] sm:$0xf]
  %v171 = vld [vmem:[%s3 + $0x18] sm:$0xf]
  %v172 = vld [vmem:[%s3 + $0x1c] sm:$0xf]
  %v173 = vld [vmem:[%s3 + $0x20] sm:$0xf]
  %v174 = vld [vmem:[%s3 + $0x24] sm:$0xf]
  %v175 = vld [vmem:[%s3 + $0x28] sm:$0xf]
  %v176 = vld [vmem:[%s3 + $0x2c] sm:$0xf]
  %v177 = vld [vmem:[%s3 + $0x30] sm:$0xf]
  %v178 = vld [vmem:[%s3 + $0x34] sm:$0xf]
  %v179 = vld [vmem:[%s3 + $0x38] sm:$0xf]
  %v180 = vld [vmem:[%s3 + $0x3c] sm:$0xf]
  %v181 = vunpack.c.l.bf16 %v165
  %v182 = vunpack.c.l.bf16 %v166
  %v183 = vunpack.c.l.bf16 %v167
  %v184 = vunpack.c.l.bf16 %v168
  %v185 = vunpack.c.l.bf16 %v169
  %v186 = vunpack.c.l.bf16 %v170
  %v187 = vunpack.c.l.bf16 %v171
  %v188 = vunpack.c.l.bf16 %v172
  %v189 = vunpack.c.l.bf16 %v173
  %v190 = vunpack.c.l.bf16 %v174
  %v191 = vunpack.c.l.bf16 %v175
  %v192 = vunpack.c.l.bf16 %v176
  %v193 = vunpack.c.l.bf16 %v177
  %v194 = vunpack.c.l.bf16 %v178
  %v195 = vunpack.c.l.bf16 %v179
  %v196 = vunpack.c.l.bf16 %v180
  %v197 = vld [vmem:[%s5] sm:$0xff]
  %v198 = vld [vmem:[%s5 + $0x8] sm:$0xff]
  %v199 = vld [vmem:[%s5 + $0x10] sm:$0xff]
  %v200 = vld [vmem:[%s5 + $0x18] sm:$0xff]
  %vm201 = vcmask 261120
  %v203 = vsel %vm201, %v181, 0
  %v206 = vsel %vm201, %v182, 0
  %v209 = vsel %vm201, %v183, 0
  %v212 = vsel %vm201, %v184, 0
  %v215 = vsel %vm201, %v185, 0
  %v218 = vsel %vm201, %v186, 0
  %v221 = vsel %vm201, %v187, 0
  %v224 = vsel %vm201, %v188, 0
  %v227 = vsel %vm201, %v189, 0
  %v230 = vsel %vm201, %v190, 0
  %v233 = vsel %vm201, %v191, 0
  %v236 = vsel %vm201, %v192, 0
  %v239 = vsel %vm201, %v193, 0
  %v242 = vsel %vm201, %v194, 0
  %v245 = vsel %vm201, %v195, 0
  %v248 = vsel %vm201, %v196, 0
  %250 = vmatprep.subr.mxu0 0.0
  %251 = vmatpush1.msra.mxu0 %v197
  %252 = vmatprep.subr.mxu0 0.0
  %253 = vmatpush1.msra.mxu0 %v198
  %254 = vmatprep.subr.mxu0 0.0
  %255 = vmatpush1.msra.mxu0 %v199
  %256 = vmatprep.subr.mxu0 0.0
  %257 = vmatpush1.msra.mxu0 %v200
  %258 = vmatprep.subr.mxu0 0.0
  %259 = vmatpush1.msra.mxu0 0.0
  %260 = vmatprep.subr.mxu0 0.0
  %261 = vmatpush1.msra.mxu0 0.0
  %262 = vmatprep.subr.mxu0 0.0
  %263 = vmatpush1.msra.mxu0 0.0
  %264 = vmatprep.subr.mxu0 0.0
  %265 = vmatpush1.msra.mxu0 0.0
  %266 = vmatprep.subr.mxu0 0.0
  %267 = vmatpush1.msra.mxu0 0.0
  %268 = vmatprep.subr.mxu0 0.0
  %269 = vmatpush1.msra.mxu0 0.0
  %270 = vmatprep.subr.mxu0 0.0
  %271 = vmatpush1.msra.mxu0 0.0
  %272 = vmatprep.subr.mxu0 0.0
  %273 = vmatpush1.msra.mxu0 0.0
  %274 = vmatprep.subr.mxu0 0.0
  %275 = vmatpush1.msra.mxu0 0.0
  %276 = vmatprep.subr.mxu0 0.0
  %277 = vmatpush1.msra.mxu0 0.0
  %278 = vmatprep.subr.mxu0 0.0
  %279 = vmatpush1.msra.mxu0 0.0
  %280 = vmatprep.subr.mxu0 0.0
  %281 = vmatpush1.msra.mxu0 0.0
  %282 = vmatprep.subr.mxu0 0.0
  %283 = vmatpush1.msra.mxu0 0.0
  %284 = vmatprep.subr.mxu0 0.0
  %285 = vmatpush1.msra.mxu0 0.0
  %286 = vmatprep.subr.mxu0 0.0
  %287 = vmatpush1.msra.mxu0 0.0
  %288 = vmatprep.subr.mxu0 0.0
  %289 = vmatpush1.msra.mxu0 0.0
  %290 = vmatprep.subr.mxu0 0.0
  %291 = vmatpush1.msra.mxu0 0.0
  %292 = vmatprep.subr.mxu0 0.0
  %293 = vmatpush1.msra.mxu0 0.0
  %294 = vmatprep.subr.mxu0 0.0
  %295 = vmatpush1.msra.mxu0 0.0
  %296 = vmatprep.subr.mxu0 0.0
  %297 = vmatpush1.msra.mxu0 0.0
  %298 = vmatprep.subr.mxu0 0.0
  %299 = vmatpush1.msra.mxu0 0.0
  %300 = vmatprep.subr.mxu0 0.0
  %301 = vmatpush1.msra.mxu0 0.0
  %302 = vmatprep.subr.mxu0 0.0
  %303 = vmatpush1.msra.mxu0 0.0
  %304 = vmatprep.subr.mxu0 0.0
  %305 = vmatpush1.msra.mxu0 0.0
  %306 = vmatprep.subr.mxu0 0.0
  %307 = vmatpush1.msra.mxu0 0.0
  %308 = vmatprep.subr.mxu0 0.0
  %309 = vmatpush1.msra.mxu0 0.0
  %310 = vmatprep.subr.mxu0 0.0
  %311 = vmatpush1.msra.mxu0 0.0
  %312 = vmatprep.subr.mxu0 0.0
  %313 = vmatpush1.msra.mxu0 0.0
  %314 = vmatprep.mubr.f32.mxu0 0.0
  %315 = vmatmul.mubr.f32.gmra.mrb[0].mxu0 %v203
  %v316 = vpop.f32.mrb[0].mxu0
  %v317 = vadd.f32 0.0, %v316
  %v318 = vpop.f32.mrb[0].mxu0
  %319 = vmatprep.mubr.f32.mxu0 0.0
  %320 = vmatmul.mubr.f32.gmra.mrb[0].mxu0 %v206
  %v321 = vpop.f32.mrb[0].mxu0
  %v322 = vadd.f32 0.0, %v321
  %v323 = vpop.f32.mrb[0].mxu0
  %324 = vmatprep.mubr.f32.mxu0 0.0
  %325 = vmatmul.mubr.f32.gmra.mrb[0].mxu0 %v209
  %v326 = vpop.f32.mrb[0].mxu0
  %v327 = vadd.f32 0.0, %v326
  %v328 = vpop.f32.mrb[0].mxu0
  %329 = vmatprep.mubr.f32.mxu0 0.0
  %330 = vmatmul.mubr.f32.gmra.mrb[0].mxu0 %v212
  %v331 = vpop.f32.mrb[0].mxu0
  %v332 = vadd.f32 0.0, %v331
  %v333 = vpop.f32.mrb[0].mxu0
  %334 = vmatprep.mubr.f32.mxu0 0.0
  %335 = vmatmul.mubr.f32.gmra.mrb[0].mxu0 %v215
  %v336 = vpop.f32.mrb[0].mxu0
  %v337 = vadd.f32 0.0, %v336
  %v338 = vpop.f32.mrb[0].mxu0
  %339 = vmatprep.mubr.f32.mxu0 0.0
  %340 = vmatmul.mubr.f32.gmra.mrb[0].mxu0 %v218
  %v341 = vpop.f32.mrb[0].mxu0
  %v342 = vadd.f32 0.0, %v341
  %v343 = vpop.f32.mrb[0].mxu0
  %344 = vmatprep.mubr.f32.mxu0 0.0
  %345 = vmatmul.mubr.f32.gmra.mrb[0].mxu0 %v221
  %v346 = vpop.f32.mrb[0].mxu0
  %v347 = vadd.f32 0.0, %v346
  %v348 = vpop.f32.mrb[0].mxu0
  %349 = vmatprep.mubr.f32.mxu0 0.0
  %350 = vmatmul.mubr.f32.gmra.mrb[0].mxu0 %v224
  %v351 = vpop.f32.mrb[0].mxu0
  %v352 = vadd.f32 0.0, %v351
  %v353 = vpop.f32.mrb[0].mxu0
  %354 = vmatprep.mubr.f32.mxu0 0.0
  %355 = vmatmul.mubr.f32.gmra.mrb[0].mxu0 %v227
  %v356 = vpop.f32.mrb[0].mxu0
  %v357 = vadd.f32 0.0, %v356
  %v358 = vpop.f32.mrb[0].mxu0
  %359 = vmatprep.mubr.f32.mxu0 0.0
  %360 = vmatmul.mubr.f32.gmra.mrb[0].mxu0 %v230
  %v361 = vpop.f32.mrb[0].mxu0
  %v362 = vadd.f32 0.0, %v361
  %v363 = vpop.f32.mrb[0].mxu0
  %364 = vmatprep.mubr.f32.mxu0 0.0
  %365 = vmatmul.mubr.f32.gmra.mrb[0].mxu0 %v233
  %v366 = vpop.f32.mrb[0].mxu0
  %v367 = vadd.f32 0.0, %v366
  %v368 = vpop.f32.mrb[0].mxu0
  %369 = vmatprep.mubr.f32.mxu0 0.0
  %370 = vmatmul.mubr.f32.gmra.mrb[0].mxu0 %v236
  %v371 = vpop.f32.mrb[0].mxu0
  %v372 = vadd.f32 0.0, %v371
  %v373 = vpop.f32.mrb[0].mxu0
  %374 = vmatprep.mubr.f32.mxu0 0.0
  %375 = vmatmul.mubr.f32.gmra.mrb[0].mxu0 %v239
  %v376 = vpop.f32.mrb[0].mxu0
  %v377 = vadd.f32 0.0, %v376
  %v378 = vpop.f32.mrb[0].mxu0
  %379 = vmatprep.mubr.f32.mxu0 0.0
  %380 = vmatmul.mubr.f32.gmra.mrb[0].mxu0 %v242
  %v381 = vpop.f32.mrb[0].mxu0
  %v382 = vadd.f32 0.0, %v381
  %v383 = vpop.f32.mrb[0].mxu0
  %384 = vmatprep.mubr.f32.mxu0 0.0
  %385 = vmatmul.mubr.f32.gmra.mrb[0].mxu0 %v245
  %v386 = vpop.f32.mrb[0].mxu0
  %v387 = vadd.f32 0.0, %v386
  %v388 = vpop.f32.mrb[0].mxu0
  %389 = vmatprep.mubr.f32.mxu0 0.0
  %390 = vmatmul.mubr.f32.gmra.mrb[0].mxu0 %v248
  %v391 = vpop.f32.mrb[0].mxu0
  %v392 = vadd.f32 0.0, %v391
  %v393 = vpop.f32.mrb[0].mxu0
  %394 = vdwg.mxu0
  %v396 = vsel %vm201, %v145, 0
  %v399 = vsel %vm201, %v146, 0
  %v402 = vsel %vm201, %v147, 0
  %v405 = vsel %vm201, %v148, 0
  %v408 = vsel %vm201, %v149, 0
  %v411 = vsel %vm201, %v150, 0
  %v414 = vsel %vm201, %v151, 0
  %v417 = vsel %vm201, %v152, 0
  %v420 = vsel %vm201, %v153, 0
  %v423 = vsel %vm201, %v154, 0
  %v426 = vsel %vm201, %v155, 0
  %v429 = vsel %vm201, %v156, 0
  %v432 = vsel %vm201, %v157, 0
  %v435 = vsel %vm201, %v158, 0
  %v438 = vsel %vm201, %v159, 0
  %v441 = vsel %vm201, %v160, 0
  %443 = vmatprep.subr.mxu0 0.0
  %444 = vmatpush1.msra.mxu0 %v161
  %445 = vmatprep.subr.mxu0 0.0
  %446 = vmatpush1.msra.mxu0 %v162
  %447 = vmatprep.subr.mxu0 0.0
  %448 = vmatpush1.msra.mxu0 %v163
  %449 = vmatprep.subr.mxu0 0.0
  %450 = vmatpush1.msra.mxu0 %v164
  %451 = vmatprep.subr.mxu0 0.0
  %452 = vmatpush1.msra.mxu0 0.0
  %453 = vmatprep.subr.mxu0 0.0
  %454 = vmatpush1.msra.mxu0 0.0
  %455 = vmatprep.subr.mxu0 0.0
  %456 = vmatpush1.msra.mxu0 0.0
  %457 = vmatprep.subr.mxu0 0.0
  %458 = vmatpush1.msra.mxu0 0.0
  %459 = vmatprep.subr.mxu0 0.0
  %460 = vmatpush1.msra.mxu0 0.0
  %461 = vmatprep.subr.mxu0 0.0
  %462 = vmatpush1.msra.mxu0 0.0
  %463 = vmatprep.subr.mxu0 0.0
  %464 = vmatpush1.msra.mxu0 0.0
  %465 = vmatprep.subr.mxu0 0.0
  %466 = vmatpush1.msra.mxu0 0.0
  %467 = vmatprep.subr.mxu0 0.0
  %468 = vmatpush1.msra.mxu0 0.0
  %469 = vmatprep.subr.mxu0 0.0
  %470 = vmatpush1.msra.mxu0 0.0
  %471 = vmatprep.subr.mxu0 0.0
  %472 = vmatpush1.msra.mxu0 0.0
  %473 = vmatprep.subr.mxu0 0.0
  %474 = vmatpush1.msra.mxu0 0.0
  %475 = vmatprep.subr.mxu0 0.0
  %476 = vmatpush1.msra.mxu0 0.0
  %477 = vmatprep.subr.mxu0 0.0
  %478 = vmatpush1.msra.mxu0 0.0
  %479 = vmatprep.subr.mxu0 0.0
  %480 = vmatpush1.msra.mxu0 0.0
  %481 = vmatprep.subr.mxu0 0.0
  %482 = vmatpush1.msra.mxu0 0.0
  %483 = vmatprep.subr.mxu0 0.0
  %484 = vmatpush1.msra.mxu0 0.0
  %485 = vmatprep.subr.mxu0 0.0
  %486 = vmatpush1.msra.mxu0 0.0
  %487 = vmatprep.subr.mxu0 0.0
  %488 = vmatpush1.msra.mxu0 0.0
  %489 = vmatprep.subr.mxu0 0.0
  %490 = vmatpush1.msra.mxu0 0.0
  %491 = vmatprep.subr.mxu0 0.0
  %492 = vmatpush1.msra.mxu0 0.0
  %493 = vmatprep.subr.mxu0 0.0
  %494 = vmatpush1.msra.mxu0 0.0
  %495 = vmatprep.subr.mxu0 0.0
  %496 = vmatpush1.msra.mxu0 0.0
  %497 = vmatprep.subr.mxu0 0.0
  %498 = vmatpush1.msra.mxu0 0.0
  %499 = vmatprep.subr.mxu0 0.0
  %500 = vmatpush1.msra.mxu0 0.0
  %501 = vmatprep.subr.mxu0 0.0
  %502 = vmatpush1.msra.mxu0 0.0
  %503 = vmatprep.subr.mxu0 0.0
  %504 = vmatpush1.msra.mxu0 0.0
  %505 = vmatprep.subr.mxu0 0.0
  %506 = vmatpush1.msra.mxu0 0.0
  %507 = vmatprep.mubr.f32.mxu0 0.0
  %508 = vmatmul.mubr.f32.gmra.mrb[0].mxu0 %v396
  %v509 = vpop.f32.mrb[0].mxu0
  %v510 = vadd.f32 %v317, %v509
  %v511 = vpop.f32.mrb[0].mxu0
  %512 = vmatprep.mubr.f32.mxu0 0.0
  %513 = vmatmul.mubr.f32.gmra.mrb[0].mxu0 %v399
  %v514 = vpop.f32.mrb[0].mxu0
  %v515 = vadd.f32 %v322, %v514
  %v516 = vpop.f32.mrb[0].mxu0
  %517 = vmatprep.mubr.f32.mxu0 0.0
  %518 = vmatmul.mubr.f32.gmra.mrb[0].mxu0 %v402
  %v519 = vpop.f32.mrb[0].mxu0
  %v520 = vadd.f32 %v327, %v519
  %v521 = vpop.f32.mrb[0].mxu0
  %522 = vmatprep.mubr.f32.mxu0 0.0
  %523 = vmatmul.mubr.f32.gmra.mrb[0].mxu0 %v405
  %v524 = vpop.f32.mrb[0].mxu0
  %v525 = vadd.f32 %v332, %v524
  %v526 = vpop.f32.mrb[0].mxu0
  %527 = vmatprep.mubr.f32.mxu0 0.0
  %528 = vmatmul.mubr.f32.gmra.mrb[0].mxu0 %v408
  %v529 = vpop.f32.mrb[0].mxu0
  %v530 = vadd.f32 %v337, %v529
  %v531 = vpop.f32.mrb[0].mxu0
  %532 = vmatprep.mubr.f32.mxu0 0.0
  %533 = vmatmul.mubr.f32.gmra.mrb[0].mxu0 %v411
  %v534 = vpop.f32.mrb[0].mxu0
  %v535 = vadd.f32 %v342, %v534
  %v536 = vpop.f32.mrb[0].mxu0
  %537 = vmatprep.mubr.f32.mxu0 0.0
  %538 = vmatmul.mubr.f32.gmra.mrb[0].mxu0 %v414
  %v539 = vpop.f32.mrb[0].mxu0
  %v540 = vadd.f32 %v347, %v539
  %v541 = vpop.f32.mrb[0].mxu0
  %542 = vmatprep.mubr.f32.mxu0 0.0
  %543 = vmatmul.mubr.f32.gmra.mrb[0].mxu0 %v417
  %v544 = vpop.f32.mrb[0].mxu0
  %v545 = vadd.f32 %v352, %v544
  %v546 = vpop.f32.mrb[0].mxu0
  %547 = vmatprep.mubr.f32.mxu0 0.0
  %548 = vmatmul.mubr.f32.gmra.mrb[0].mxu0 %v420
  %v549 = vpop.f32.mrb[0].mxu0
  %v550 = vadd.f32 %v357, %v549
  %v551 = vpop.f32.mrb[0].mxu0
  %552 = vmatprep.mubr.f32.mxu0 0.0
  %553 = vmatmul.mubr.f32.gmra.mrb[0].mxu0 %v423
  %v554 = vpop.f32.mrb[0].mxu0
  %v555 = vadd.f32 %v362, %v554
  %v556 = vpop.f32.mrb[0].mxu0
  %557 = vmatprep.mubr.f32.mxu0 0.0
  %558 = vmatmul.mubr.f32.gmra.mrb[0].mxu0 %v426
  %v559 = vpop.f32.mrb[0].mxu0
  %v560 = vadd.f32 %v367, %v559
  %v561 = vpop.f32.mrb[0].mxu0
  %562 = vmatprep.mubr.f32.mxu0 0.0
  %563 = vmatmul.mubr.f32.gmra.mrb[0].mxu0 %v429
  %v564 = vpop.f32.mrb[0].mxu0
  %v565 = vadd.f32 %v372, %v564
  %v566 = vpop.f32.mrb[0].mxu0
  %567 = vmatprep.mubr.f32.mxu0 0.0
  %568 = vmatmul.mubr.f32.gmra.mrb[0].mxu0 %v432
  %v569 = vpop.f32.mrb[0].mxu0
  %v570 = vadd.f32 %v377, %v569
  %v571 = vpop.f32.mrb[0].mxu0
  %572 = vmatprep.mubr.f32.mxu0 0.0
  %573 = vmatmul.mubr.f32.gmra.mrb[0].mxu0 %v435
  %v574 = vpop.f32.mrb[0].mxu0
  %v575 = vadd.f32 %v382, %v574
  %v576 = vpop.f32.mrb[0].mxu0
  %577 = vmatprep.mubr.f32.mxu0 0.0
  %578 = vmatmul.mubr.f32.gmra.mrb[0].mxu0 %v438
  %v579 = vpop.f32.mrb[0].mxu0
  %v580 = vadd.f32 %v387, %v579
  %v581 = vpop.f32.mrb[0].mxu0
  %582 = vmatprep.mubr.f32.mxu0 0.0
  %583 = vmatmul.mubr.f32.gmra.mrb[0].mxu0 %v441
  %v584 = vpop.f32.mrb[0].mxu0
  %v585 = vadd.f32 %v392, %v584
  %v586 = vpop.f32.mrb[0].mxu0
  %587 = vdwg.mxu0
  %v588 = vld [vmem:[%s6] sm:$0x1]
  %v590 = vlaneseq
  %v591 = vshrl.u32 %v590, 7
  %v592 = vsub.s32 0, %v591
  %v593 = vrot.slane %v588, %v592
  %v595 = vadd.f32 %v510, %v593
  %v596 = vadd.f32 %v515, %v593
  %v597 = vadd.f32 %v520, %v593
  %v598 = vadd.f32 %v525, %v593
  %v599 = vadd.f32 %v530, %v593
  %v600 = vadd.f32 %v535, %v593
  %v601 = vadd.f32 %v540, %v593
  %v602 = vadd.f32 %v545, %v593
  %v603 = vadd.f32 %v550, %v593
  %v604 = vadd.f32 %v555, %v593
  %v605 = vadd.f32 %v560, %v593
  %v606 = vadd.f32 %v565, %v593
  %v607 = vadd.f32 %v570, %v593
  %v608 = vadd.f32 %v575, %v593
  %v609 = vadd.f32 %v580, %v593
  %v610 = vadd.f32 %v585, %v593
  %v611 = vmax.f32 %v595, 0.0
  %v612 = vmax.f32 %v596, 0.0
  %v613 = vmax.f32 %v597, 0.0
  %v614 = vmax.f32 %v598, 0.0
  %v615 = vmax.f32 %v599, 0.0
  %v616 = vmax.f32 %v600, 0.0
  %v617 = vmax.f32 %v601, 0.0
  %v618 = vmax.f32 %v602, 0.0
  %v619 = vmax.f32 %v603, 0.0
  %v620 = vmax.f32 %v604, 0.0
  %v621 = vmax.f32 %v605, 0.0
  %v622 = vmax.f32 %v606, 0.0
  %v623 = vmax.f32 %v607, 0.0
  %v624 = vmax.f32 %v608, 0.0
  %v625 = vmax.f32 %v609, 0.0
  %v626 = vmax.f32 %v610, 0.0
  %v627 = vld [vmem:[%s7] sm:$0xff]
  %v628 = vld [vmem:[%s7 + $0x8] sm:$0xff]
  %v629 = vld [vmem:[%s7 + $0x10] sm:$0xff]
  %v630 = vld [vmem:[%s7 + $0x18] sm:$0xff]
  %v631 = vld [vmem:[%s7 + $0x20] sm:$0xff]
  %v632 = vld [vmem:[%s7 + $0x28] sm:$0xff]
  %v633 = vld [vmem:[%s7 + $0x30] sm:$0xff]
  %v634 = vld [vmem:[%s7 + $0x38] sm:$0xff]
  %v635 = vld [vmem:[%s8] sm:$0x1]
  %v637 = vlaneseq
  %v638 = vshrl.u32 %v637, 7
  %v639 = vsub.s32 0, %v638
  %v640 = vrot.slane %v635, %v639
  %vm642 = vcmask 523264
  %v644 = vsel %vm642, %v611, 0
  %v647 = vsel %vm642, %v612, 0
  %v650 = vsel %vm642, %v613, 0
  %v653 = vsel %vm642, %v614, 0
  %v656 = vsel %vm642, %v615, 0
  %v659 = vsel %vm642, %v616, 0
  %v662 = vsel %vm642, %v617, 0
  %v665 = vsel %vm642, %v618, 0
  %v668 = vsel %vm642, %v619, 0
  %v671 = vsel %vm642, %v620, 0
  %v674 = vsel %vm642, %v621, 0
  %v677 = vsel %vm642, %v622, 0
  %v680 = vsel %vm642, %v623, 0
  %v683 = vsel %vm642, %v624, 0
  %v686 = vsel %vm642, %v625, 0
  %v689 = vsel %vm642, %v626, 0
  %691 = vmatprep.subr.mxu0 0.0
  %692 = vmatpush1.msra.mxu0 %v627
  %693 = vmatprep.subr.mxu0 0.0
  %694 = vmatpush1.msra.mxu0 %v628
  %695 = vmatprep.subr.mxu0 0.0
  %696 = vmatpush1.msra.mxu0 %v629
  %697 = vmatprep.subr.mxu0 0.0
  %698 = vmatpush1.msra.mxu0 %v630
  %699 = vmatprep.subr.mxu0 0.0
  %700 = vmatpush1.msra.mxu0 %v631
  %701 = vmatprep.subr.mxu0 0.0
  %702 = vmatpush1.msra.mxu0 %v632
  %703 = vmatprep.subr.mxu0 0.0
  %704 = vmatpush1.msra.mxu0 %v633
  %705 = vmatprep.subr.mxu0 0.0
  %706 = vmatpush1.msra.mxu0 %v634
  %707 = vmatprep.subr.mxu0 0.0
  %708 = vmatpush1.msra.mxu0 0.0
  %709 = vmatprep.subr.mxu0 0.0
  %710 = vmatpush1.msra.mxu0 0.0
  %711 = vmatprep.subr.mxu0 0.0
  %712 = vmatpush1.msra.mxu0 0.0
  %713 = vmatprep.subr.mxu0 0.0
  %714 = vmatpush1.msra.mxu0 0.0
  %715 = vmatprep.subr.mxu0 0.0
  %716 = vmatpush1.msra.mxu0 0.0
  %717 = vmatprep.subr.mxu0 0.0
  %718 = vmatpush1.msra.mxu0 0.0
  %719 = vmatprep.subr.mxu0 0.0
  %720 = vmatpush1.msra.mxu0 0.0
  %721 = vmatprep.subr.mxu0 0.0
  %722 = vmatpush1.msra.mxu0 0.0
  %723 = vmatprep.subr.mxu0 0.0
  %724 = vmatpush1.msra.mxu0 0.0
  %725 = vmatprep.subr.mxu0 0.0
  %726 = vmatpush1.msra.mxu0 0.0
  %727 = vmatprep.subr.mxu0 0.0
  %728 = vmatpush1.msra.mxu0 0.0
  %729 = vmatprep.subr.mxu0 0.0
  %730 = vmatpush1.msra.mxu0 0.0
  %731 = vmatprep.subr.mxu0 0.0
  %732 = vmatpush1.msra.mxu0 0.0
  %733 = vmatprep.subr.mxu0 0.0
  %734 = vmatpush1.msra.mxu0 0.0
  %735 = vmatprep.subr.mxu0 0.0
  %736 = vmatpush1.msra.mxu0 0.0
  %737 = vmatprep.subr.mxu0 0.0
  %738 = vmatpush1.msra.mxu0 0.0
  %739 = vmatprep.subr.mxu0 0.0
  %740 = vmatpush1.msra.mxu0 0.0
  %741 = vmatprep.subr.mxu0 0.0
  %742 = vmatpush1.msra.mxu0 0.0
  %743 = vmatprep.subr.mxu0 0.0
  %744 = vmatpush1.msra.mxu0 0.0
  %745 = vmatprep.subr.mxu0 0.0
  %746 = vmatpush1.msra.mxu0 0.0
  %747 = vmatprep.subr.mxu0 0.0
  %748 = vmatpush1.msra.mxu0 0.0
  %749 = vmatprep.subr.mxu0 0.0
  %750 = vmatpush1.msra.mxu0 0.0
  %751 = vmatprep.subr.mxu0 0.0
  %752 = vmatpush1.msra.mxu0 0.0
  %753 = vmatprep.subr.mxu0 0.0
  %754 = vmatpush1.msra.mxu0 0.0
  %755 = vmatprep.mubr.f32.mxu0 0.0
  %756 = vmatmul.mubr.f32.gmra.mrb[0].mxu0 %v644
  %v757 = vpop.f32.mrb[0].mxu0
  %v758 = vadd.f32 %v640, %v757
  %v759 = vpop.f32.mrb[0].mxu0
  %760 = vmatprep.mubr.f32.mxu0 0.0
  %761 = vmatmul.mubr.f32.gmra.mrb[0].mxu0 %v647
  %v762 = vpop.f32.mrb[0].mxu0
  %v763 = vadd.f32 %v640, %v762
  %v764 = vpop.f32.mrb[0].mxu0
  %765 = vmatprep.mubr.f32.mxu0 0.0
  %766 = vmatmul.mubr.f32.gmra.mrb[0].mxu0 %v650
  %v767 = vpop.f32.mrb[0].mxu0
  %v768 = vadd.f32 %v640, %v767
  %v769 = vpop.f32.mrb[0].mxu0
  %770 = vmatprep.mubr.f32.mxu0 0.0
  %771 = vmatmul.mubr.f32.gmra.mrb[0].mxu0 %v653
  %v772 = vpop.f32.mrb[0].mxu0
  %v773 = vadd.f32 %v640, %v772
  %v774 = vpop.f32.mrb[0].mxu0
  %775 = vmatprep.mubr.f32.mxu0 0.0
  %776 = vmatmul.mubr.f32.gmra.mrb[0].mxu0 %v656
  %v777 = vpop.f32.mrb[0].mxu0
  %v778 = vadd.f32 %v640, %v777
  %v779 = vpop.f32.mrb[0].mxu0
  %780 = vmatprep.mubr.f32.mxu0 0.0
  %781 = vmatmul.mubr.f32.gmra.mrb[0].mxu0 %v659
  %v782 = vpop.f32.mrb[0].mxu0
  %v783 = vadd.f32 %v640, %v782
  %v784 = vpop.f32.mrb[0].mxu0
  %785 = vmatprep.mubr.f32.mxu0 0.0
  %786 = vmatmul.mubr.f32.gmra.mrb[0].mxu0 %v662
  %v787 = vpop.f32.mrb[0].mxu0
  %v788 = vadd.f32 %v640, %v787
  %v789 = vpop.f32.mrb[0].mxu0
  %790 = vmatprep.mubr.f32.mxu0 0.0
  %791 = vmatmul.mubr.f32.gmra.mrb[0].mxu0 %v665
  %v792 = vpop.f32.mrb[0].mxu0
  %v793 = vadd.f32 %v640, %v792
  %v794 = vpop.f32.mrb[0].mxu0
  %795 = vmatprep.mubr.f32.mxu0 0.0
  %796 = vmatmul.mubr.f32.gmra.mrb[0].mxu0 %v668
  %v797 = vpop.f32.mrb[0].mxu0
  %v798 = vadd.f32 %v640, %v797
  %v799 = vpop.f32.mrb[0].mxu0
  %800 = vmatprep.mubr.f32.mxu0 0.0
  %801 = vmatmul.mubr.f32.gmra.mrb[0].mxu0 %v671
  %v802 = vpop.f32.mrb[0].mxu0
  %v803 = vadd.f32 %v640, %v802
  %v804 = vpop.f32.mrb[0].mxu0
  %805 = vmatprep.mubr.f32.mxu0 0.0
  %806 = vmatmul.mubr.f32.gmra.mrb[0].mxu0 %v674
  %v807 = vpop.f32.mrb[0].mxu0
  %v808 = vadd.f32 %v640, %v807
  %v809 = vpop.f32.mrb[0].mxu0
  %810 = vmatprep.mubr.f32.mxu0 0.0
  %811 = vmatmul.mubr.f32.gmra.mrb[0].mxu0 %v677
  %v812 = vpop.f32.mrb[0].mxu0
  %v813 = vadd.f32 %v640, %v812
  %v814 = vpop.f32.mrb[0].mxu0
  %815 = vmatprep.mubr.f32.mxu0 0.0
  %816 = vmatmul.mubr.f32.gmra.mrb[0].mxu0 %v680
  %v817 = vpop.f32.mrb[0].mxu0
  %v818 = vadd.f32 %v640, %v817
  %v819 = vpop.f32.mrb[0].mxu0
  %820 = vmatprep.mubr.f32.mxu0 0.0
  %821 = vmatmul.mubr.f32.gmra.mrb[0].mxu0 %v683
  %v822 = vpop.f32.mrb[0].mxu0
  %v823 = vadd.f32 %v640, %v822
  %v824 = vpop.f32.mrb[0].mxu0
  %825 = vmatprep.mubr.f32.mxu0 0.0
  %826 = vmatmul.mubr.f32.gmra.mrb[0].mxu0 %v686
  %v827 = vpop.f32.mrb[0].mxu0
  %v828 = vadd.f32 %v640, %v827
  %v829 = vpop.f32.mrb[0].mxu0
  %830 = vmatprep.mubr.f32.mxu0 0.0
  %831 = vmatmul.mubr.f32.gmra.mrb[0].mxu0 %v689
  %v832 = vpop.f32.mrb[0].mxu0
  %v833 = vadd.f32 %v640, %v832
  %v834 = vpop.f32.mrb[0].mxu0
  %835 = vdwg.mxu0
  %v836 = vmax.f32 %v758, 0.0
  %v837 = vmax.f32 %v763, 0.0
  %v838 = vmax.f32 %v768, 0.0
  %v839 = vmax.f32 %v773, 0.0
  %v840 = vmax.f32 %v778, 0.0
  %v841 = vmax.f32 %v783, 0.0
  %v842 = vmax.f32 %v788, 0.0
  %v843 = vmax.f32 %v793, 0.0
  %v844 = vmax.f32 %v798, 0.0
  %v845 = vmax.f32 %v803, 0.0
  %v846 = vmax.f32 %v808, 0.0
  %v847 = vmax.f32 %v813, 0.0
  %v848 = vmax.f32 %v818, 0.0
  %v849 = vmax.f32 %v823, 0.0
  %v850 = vmax.f32 %v828, 0.0
  %v851 = vmax.f32 %v833, 0.0
  %v852 = vld [vmem:[%s9] sm:$0xff]
  %v853 = vld [vmem:[%s9 + $0x8] sm:$0xff]
  %v854 = vld [vmem:[%s9 + $0x10] sm:$0xff]
  %v855 = vld [vmem:[%s9 + $0x18] sm:$0xff]
  %v856 = vld [vmem:[%s10] sm:$0x1]
  %v858 = vlaneseq
  %v859 = vshrl.u32 %v858, 7
  %v860 = vsub.s32 0, %v859
  %v861 = vrot.slane %v856, %v860
  %v864 = vsel %vm201, %v836, 0
  %v867 = vsel %vm201, %v837, 0
  %v870 = vsel %vm201, %v838, 0
  %v873 = vsel %vm201, %v839, 0
  %v876 = vsel %vm201, %v840, 0
  %v879 = vsel %vm201, %v841, 0
  %v882 = vsel %vm201, %v842, 0
  %v885 = vsel %vm201, %v843, 0
  %v888 = vsel %vm201, %v844, 0
  %v891 = vsel %vm201, %v845, 0
  %v894 = vsel %vm201, %v846, 0
  %v897 = vsel %vm201, %v847, 0
  %v900 = vsel %vm201, %v848, 0
  %v903 = vsel %vm201, %v849, 0
  %v906 = vsel %vm201, %v850, 0
  %v909 = vsel %vm201, %v851, 0
  %911 = vmatprep.subr.mxu0 0.0
  %912 = vmatpush1.msra.mxu0 %v852
  %913 = vmatprep.subr.mxu0 0.0
  %914 = vmatpush1.msra.mxu0 %v853
  %915 = vmatprep.subr.mxu0 0.0
  %916 = vmatpush1.msra.mxu0 %v854
  %917 = vmatprep.subr.mxu0 0.0
  %918 = vmatpush1.msra.mxu0 %v855
  %919 = vmatprep.subr.mxu0 0.0
  %920 = vmatpush1.msra.mxu0 0.0
  %921 = vmatprep.subr.mxu0 0.0
  %922 = vmatpush1.msra.mxu0 0.0
  %923 = vmatprep.subr.mxu0 0.0
  %924 = vmatpush1.msra.mxu0 0.0
  %925 = vmatprep.subr.mxu0 0.0
  %926 = vmatpush1.msra.mxu0 0.0
  %927 = vmatprep.subr.mxu0 0.0
  %928 = vmatpush1.msra.mxu0 0.0
  %929 = vmatprep.subr.mxu0 0.0
  %930 = vmatpush1.msra.mxu0 0.0
  %931 = vmatprep.subr.mxu0 0.0
  %932 = vmatpush1.msra.mxu0 0.0
  %933 = vmatprep.subr.mxu0 0.0
  %934 = vmatpush1.msra.mxu0 0.0
  %935 = vmatprep.subr.mxu0 0.0
  %936 = vmatpush1.msra.mxu0 0.0
  %937 = vmatprep.subr.mxu0 0.0
  %938 = vmatpush1.msra.mxu0 0.0
  %939 = vmatprep.subr.mxu0 0.0
  %940 = vmatpush1.msra.mxu0 0.0
  %941 = vmatprep.subr.mxu0 0.0
  %942 = vmatpush1.msra.mxu0 0.0
  %943 = vmatprep.subr.mxu0 0.0
  %944 = vmatpush1.msra.mxu0 0.0
  %945 = vmatprep.subr.mxu0 0.0
  %946 = vmatpush1.msra.mxu0 0.0
  %947 = vmatprep.subr.mxu0 0.0
  %948 = vmatpush1.msra.mxu0 0.0
  %949 = vmatprep.subr.mxu0 0.0
  %950 = vmatpush1.msra.mxu0 0.0
  %951 = vmatprep.subr.mxu0 0.0
  %952 = vmatpush1.msra.mxu0 0.0
  %953 = vmatprep.subr.mxu0 0.0
  %954 = vmatpush1.msra.mxu0 0.0
  %955 = vmatprep.subr.mxu0 0.0
  %956 = vmatpush1.msra.mxu0 0.0
  %957 = vmatprep.subr.mxu0 0.0
  %958 = vmatpush1.msra.mxu0 0.0
  %959 = vmatprep.subr.mxu0 0.0
  %960 = vmatpush1.msra.mxu0 0.0
  %961 = vmatprep.subr.mxu0 0.0
  %962 = vmatpush1.msra.mxu0 0.0
  %963 = vmatprep.subr.mxu0 0.0
  %964 = vmatpush1.msra.mxu0 0.0
  %965 = vmatprep.subr.mxu0 0.0
  %966 = vmatpush1.msra.mxu0 0.0
  %967 = vmatprep.subr.mxu0 0.0
  %968 = vmatpush1.msra.mxu0 0.0
  %969 = vmatprep.subr.mxu0 0.0
  %970 = vmatpush1.msra.mxu0 0.0
  %971 = vmatprep.subr.mxu0 0.0
  %972 = vmatpush1.msra.mxu0 0.0
  %973 = vmatprep.subr.mxu0 0.0
  %974 = vmatpush1.msra.mxu0 0.0
  %975 = vmatprep.mubr.f32.mxu0 0.0
  %976 = vmatmul.mubr.f32.gmra.mrb[0].mxu0 %v864
  %v977 = vpop.f32.mrb[0].mxu0
  %v978 = vadd.f32 %v861, %v977
  %v979 = vpop.f32.mrb[0].mxu0
  %980 = vmatprep.mubr.f32.mxu0 0.0
  %981 = vmatmul.mubr.f32.gmra.mrb[0].mxu0 %v867
  %v982 = vpop.f32.mrb[0].mxu0
  %v983 = vadd.f32 %v861, %v982
  %v984 = vpop.f32.mrb[0].mxu0
  %985 = vmatprep.mubr.f32.mxu0 0.0
  %986 = vmatmul.mubr.f32.gmra.mrb[0].mxu0 %v870
  %v987 = vpop.f32.mrb[0].mxu0
  %v988 = vadd.f32 %v861, %v987
  %v989 = vpop.f32.mrb[0].mxu0
  %990 = vmatprep.mubr.f32.mxu0 0.0
  %991 = vmatmul.mubr.f32.gmra.mrb[0].mxu0 %v873
  %v992 = vpop.f32.mrb[0].mxu0
  %v993 = vadd.f32 %v861, %v992
  %v994 = vpop.f32.mrb[0].mxu0
  %995 = vmatprep.mubr.f32.mxu0 0.0
  %996 = vmatmul.mubr.f32.gmra.mrb[0].mxu0 %v876
  %v997 = vpop.f32.mrb[0].mxu0
  %v998 = vadd.f32 %v861, %v997
  %v999 = vpop.f32.mrb[0].mxu0
  %1000 = vmatprep.mubr.f32.mxu0 0.0
  %1001 = vmatmul.mubr.f32.gmra.mrb[0].mxu0 %v879
  %v1002 = vpop.f32.mrb[0].mxu0
  %v1003 = vadd.f32 %v861, %v1002
  %v1004 = vpop.f32.mrb[0].mxu0
  %1005 = vmatprep.mubr.f32.mxu0 0.0
  %1006 = vmatmul.mubr.f32.gmra.mrb[0].mxu0 %v882
  %v1007 = vpop.f32.mrb[0].mxu0
  %v1008 = vadd.f32 %v861, %v1007
  %v1009 = vpop.f32.mrb[0].mxu0
  %1010 = vmatprep.mubr.f32.mxu0 0.0
  %1011 = vmatmul.mubr.f32.gmra.mrb[0].mxu0 %v885
  %v1012 = vpop.f32.mrb[0].mxu0
  %v1013 = vadd.f32 %v861, %v1012
  %v1014 = vpop.f32.mrb[0].mxu0
  %1015 = vmatprep.mubr.f32.mxu0 0.0
  %1016 = vmatmul.mubr.f32.gmra.mrb[0].mxu0 %v888
  %v1017 = vpop.f32.mrb[0].mxu0
  %v1018 = vadd.f32 %v861, %v1017
  %v1019 = vpop.f32.mrb[0].mxu0
  %1020 = vmatprep.mubr.f32.mxu0 0.0
  %1021 = vmatmul.mubr.f32.gmra.mrb[0].mxu0 %v891
  %v1022 = vpop.f32.mrb[0].mxu0
  %v1023 = vadd.f32 %v861, %v1022
  %v1024 = vpop.f32.mrb[0].mxu0
  %1025 = vmatprep.mubr.f32.mxu0 0.0
  %1026 = vmatmul.mubr.f32.gmra.mrb[0].mxu0 %v894
  %v1027 = vpop.f32.mrb[0].mxu0
  %v1028 = vadd.f32 %v861, %v1027
  %v1029 = vpop.f32.mrb[0].mxu0
  %1030 = vmatprep.mubr.f32.mxu0 0.0
  %1031 = vmatmul.mubr.f32.gmra.mrb[0].mxu0 %v897
  %v1032 = vpop.f32.mrb[0].mxu0
  %v1033 = vadd.f32 %v861, %v1032
  %v1034 = vpop.f32.mrb[0].mxu0
  %1035 = vmatprep.mubr.f32.mxu0 0.0
  %1036 = vmatmul.mubr.f32.gmra.mrb[0].mxu0 %v900
  %v1037 = vpop.f32.mrb[0].mxu0
  %v1038 = vadd.f32 %v861, %v1037
  %v1039 = vpop.f32.mrb[0].mxu0
  %1040 = vmatprep.mubr.f32.mxu0 0.0
  %1041 = vmatmul.mubr.f32.gmra.mrb[0].mxu0 %v903
  %v1042 = vpop.f32.mrb[0].mxu0
  %v1043 = vadd.f32 %v861, %v1042
  %v1044 = vpop.f32.mrb[0].mxu0
  %1045 = vmatprep.mubr.f32.mxu0 0.0
  %1046 = vmatmul.mubr.f32.gmra.mrb[0].mxu0 %v906
  %v1047 = vpop.f32.mrb[0].mxu0
  %v1048 = vadd.f32 %v861, %v1047
  %v1049 = vpop.f32.mrb[0].mxu0
  %1050 = vmatprep.mubr.f32.mxu0 0.0
  %1051 = vmatmul.mubr.f32.gmra.mrb[0].mxu0 %v909
  %v1052 = vpop.f32.mrb[0].mxu0
  %v1053 = vadd.f32 %v861, %v1052
  %v1054 = vpop.f32.mrb[0].mxu0
  %1055 = vdwg.mxu0
  %v1056 = vmax.f32 %v978, 0.0
  %v1057 = vmax.f32 %v983, 0.0
  %v1058 = vmax.f32 %v988, 0.0
  %v1059 = vmax.f32 %v993, 0.0
  %v1060 = vmax.f32 %v998, 0.0
  %v1061 = vmax.f32 %v1003, 0.0
  %v1062 = vmax.f32 %v1008, 0.0
  %v1063 = vmax.f32 %v1013, 0.0
  %v1064 = vmax.f32 %v1018, 0.0
  %v1065 = vmax.f32 %v1023, 0.0
  %v1066 = vmax.f32 %v1028, 0.0
  %v1067 = vmax.f32 %v1033, 0.0
  %v1068 = vmax.f32 %v1038, 0.0
  %v1069 = vmax.f32 %v1043, 0.0
  %v1070 = vmax.f32 %v1048, 0.0
  %v1071 = vmax.f32 %v1053, 0.0
  %v1072 = vld [vmem:[%s11] sm:$0xff]
  %v1073 = vld [vmem:[%s12] sm:$0xff]
  %vm1074 = vcmask 130048
  %v1076 = vsel %vm1074, %v1073, 0
  %v1079 = vsel %vm1074, %v1056, 0
  %v1082 = vsel %vm1074, %v1057, 0
  %v1085 = vsel %vm1074, %v1058, 0
  %v1088 = vsel %vm1074, %v1059, 0
  %v1091 = vsel %vm1074, %v1060, 0
  %v1094 = vsel %vm1074, %v1061, 0
  %v1097 = vsel %vm1074, %v1062, 0
  %v1100 = vsel %vm1074, %v1063, 0
  %v1103 = vsel %vm1074, %v1064, 0
  %v1106 = vsel %vm1074, %v1065, 0
  %v1109 = vsel %vm1074, %v1066, 0
  %v1112 = vsel %vm1074, %v1067, 0
  %v1115 = vsel %vm1074, %v1068, 0
  %v1118 = vsel %vm1074, %v1069, 0
  %v1121 = vsel %vm1074, %v1070, 0
  %v1124 = vsel %vm1074, %v1071, 0
  %1126 = vmatprep.subr.mxu0 0.0
  %1127 = vmatpush1.xpose.msra.mxu0 %v1079
  %1128 = vmatprep.subr.mxu0 0.0
  %1129 = vmatpush1.xpose.msra.mxu0 %v1082
  %1130 = vmatprep.subr.mxu0 0.0
  %1131 = vmatpush1.xpose.msra.mxu0 %v1085
  %1132 = vmatprep.subr.mxu0 0.0
  %1133 = vmatpush1.xpose.msra.mxu0 %v1088
  %1134 = vmatprep.subr.mxu0 0.0
  %1135 = vmatpush1.xpose.msra.mxu0 %v1091
  %1136 = vmatprep.subr.mxu0 0.0
  %1137 = vmatpush1.xpose.msra.mxu0 %v1094
  %1138 = vmatprep.subr.mxu0 0.0
  %1139 = vmatpush1.xpose.msra.mxu0 %v1097
  %1140 = vmatprep.subr.mxu0 0.0
  %1141 = vmatpush1.xpose.msra.mxu0 %v1100
  %1142 = vmatprep.subr.mxu0 0.0
  %1143 = vmatpush1.xpose.msra.mxu0 %v1103
  %1144 = vmatprep.subr.mxu0 0.0
  %1145 = vmatpush1.xpose.msra.mxu0 %v1106
  %1146 = vmatprep.subr.mxu0 0.0
  %1147 = vmatpush1.xpose.msra.mxu0 %v1109
  %1148 = vmatprep.subr.mxu0 0.0
  %1149 = vmatpush1.xpose.msra.mxu0 %v1112
  %1150 = vmatprep.subr.mxu0 0.0
  %1151 = vmatpush1.xpose.msra.mxu0 %v1115
  %1152 = vmatprep.subr.mxu0 0.0
  %1153 = vmatpush1.xpose.msra.mxu0 %v1118
  %1154 = vmatprep.subr.mxu0 0.0
  %1155 = vmatpush1.xpose.msra.mxu0 %v1121
  %1156 = vmatprep.subr.mxu0 0.0
  %1157 = vmatpush1.xpose.msra.mxu0 %v1124
  %1158 = vmatprep.subr.mxu0 0.0
  %1159 = vmatpush1.xpose.msra.mxu0 0.0
  %1160 = vmatprep.subr.mxu0 0.0
  %1161 = vmatpush1.xpose.msra.mxu0 0.0
  %1162 = vmatprep.subr.mxu0 0.0
  %1163 = vmatpush1.xpose.msra.mxu0 0.0
  %1164 = vmatprep.subr.mxu0 0.0
  %1165 = vmatpush1.xpose.msra.mxu0 0.0
  %1166 = vmatprep.subr.mxu0 0.0
  %1167 = vmatpush1.xpose.msra.mxu0 0.0
  %1168 = vmatprep.subr.mxu0 0.0
  %1169 = vmatpush1.xpose.msra.mxu0 0.0
  %1170 = vmatprep.subr.mxu0 0.0
  %1171 = vmatpush1.xpose.msra.mxu0 0.0
  %1172 = vmatprep.subr.mxu0 0.0
  %1173 = vmatpush1.xpose.msra.mxu0 0.0
  %1174 = vmatprep.subr.mxu0 0.0
  %1175 = vmatpush1.xpose.msra.mxu0 0.0
  %1176 = vmatprep.subr.mxu0 0.0
  %1177 = vmatpush1.xpose.msra.mxu0 0.0
  %1178 = vmatprep.subr.mxu0 0.0
  %1179 = vmatpush1.xpose.msra.mxu0 0.0
  %1180 = vmatprep.subr.mxu0 0.0
  %1181 = vmatpush1.xpose.msra.mxu0 0.0
  %1182 = vmatprep.subr.mxu0 0.0
  %1183 = vmatpush1.xpose.msra.mxu0 0.0
  %1184 = vmatprep.subr.mxu0 0.0
  %1185 = vmatpush1.xpose.msra.mxu0 0.0
  %1186 = vmatprep.subr.mxu0 0.0
  %1187 = vmatpush1.xpose.msra.mxu0 0.0
  %1188 = vmatprep.subr.mxu0 0.0
  %1189 = vmatpush1.xpose.msra.mxu0 0.0
  %1190 = vmatprep.mubr.f32.mxu0 0.0
  %1191 = vmatmul.mubr.f32.gmra.mrb[0].mxu0 %v1076
  %v1192 = vpop.f32.mrb[0].mxu0
  %v1193 = vadd.f32 0.0, %v1192
  %v1194 = vpop.f32.mrb[0].mxu0
  %1195 = vdwg.mxu0
  %v1197 = vsel %vm201, %v1072, 0
  %v1200 = vsel %vm201, %v113, 0
  %v1203 = vsel %vm201, %v114, 0
  %v1206 = vsel %vm201, %v115, 0
  %v1209 = vsel %vm201, %v116, 0
  %v1212 = vsel %vm201, %v117, 0
  %v1215 = vsel %vm201, %v118, 0
  %v1218 = vsel %vm201, %v119, 0
  %v1221 = vsel %vm201, %v120, 0
  %v1224 = vsel %vm201, %v121, 0
  %v1227 = vsel %vm201, %v122, 0
  %v1230 = vsel %vm201, %v123, 0
  %v1233 = vsel %vm201, %v124, 0
  %v1236 = vsel %vm201, %v125, 0
  %v1239 = vsel %vm201, %v126, 0
  %v1242 = vsel %vm201, %v127, 0
  %v1245 = vsel %vm201, %v128, 0
  %1247 = vmatprep.subr.mxu0 0.0
  %1248 = vmatpush1.xpose.msra.mxu0 %v1200
  %1249 = vmatprep.subr.mxu0 0.0
  %1250 = vmatpush1.xpose.msra.mxu0 %v1203
  %1251 = vmatprep.subr.mxu0 0.0
  %1252 = vmatpush1.xpose.msra.mxu0 %v1206
  %1253 = vmatprep.subr.mxu0 0.0
  %1254 = vmatpush1.xpose.msra.mxu0 %v1209
  %1255 = vmatprep.subr.mxu0 0.0
  %1256 = vmatpush1.xpose.msra.mxu0 %v1212
  %1257 = vmatprep.subr.mxu0 0.0
  %1258 = vmatpush1.xpose.msra.mxu0 %v1215
  %1259 = vmatprep.subr.mxu0 0.0
  %1260 = vmatpush1.xpose.msra.mxu0 %v1218
  %1261 = vmatprep.subr.mxu0 0.0
  %1262 = vmatpush1.xpose.msra.mxu0 %v1221
  %1263 = vmatprep.subr.mxu0 0.0
  %1264 = vmatpush1.xpose.msra.mxu0 %v1224
  %1265 = vmatprep.subr.mxu0 0.0
  %1266 = vmatpush1.xpose.msra.mxu0 %v1227
  %1267 = vmatprep.subr.mxu0 0.0
  %1268 = vmatpush1.xpose.msra.mxu0 %v1230
  %1269 = vmatprep.subr.mxu0 0.0
  %1270 = vmatpush1.xpose.msra.mxu0 %v1233
  %1271 = vmatprep.subr.mxu0 0.0
  %1272 = vmatpush1.xpose.msra.mxu0 %v1236
  %1273 = vmatprep.subr.mxu0 0.0
  %1274 = vmatpush1.xpose.msra.mxu0 %v1239
  %1275 = vmatprep.subr.mxu0 0.0
  %1276 = vmatpush1.xpose.msra.mxu0 %v1242
  %1277 = vmatprep.subr.mxu0 0.0
  %1278 = vmatpush1.xpose.msra.mxu0 %v1245
  %1279 = vmatprep.subr.mxu0 0.0
  %1280 = vmatpush1.xpose.msra.mxu0 0.0
  %1281 = vmatprep.subr.mxu0 0.0
  %1282 = vmatpush1.xpose.msra.mxu0 0.0
  %1283 = vmatprep.subr.mxu0 0.0
  %1284 = vmatpush1.xpose.msra.mxu0 0.0
  %1285 = vmatprep.subr.mxu0 0.0
  %1286 = vmatpush1.xpose.msra.mxu0 0.0
  %1287 = vmatprep.subr.mxu0 0.0
  %1288 = vmatpush1.xpose.msra.mxu0 0.0
  %1289 = vmatprep.subr.mxu0 0.0
  %1290 = vmatpush1.xpose.msra.mxu0 0.0
  %1291 = vmatprep.subr.mxu0 0.0
  %1292 = vmatpush1.xpose.msra.mxu0 0.0
  %1293 = vmatprep.subr.mxu0 0.0
  %1294 = vmatpush1.xpose.msra.mxu0 0.0
  %1295 = vmatprep.subr.mxu0 0.0
  %1296 = vmatpush1.xpose.msra.mxu0 0.0
  %1297 = vmatprep.subr.mxu0 0.0
  %1298 = vmatpush1.xpose.msra.mxu0 0.0
  %1299 = vmatprep.subr.mxu0 0.0
  %1300 = vmatpush1.xpose.msra.mxu0 0.0
  %1301 = vmatprep.subr.mxu0 0.0
  %1302 = vmatpush1.xpose.msra.mxu0 0.0
  %1303 = vmatprep.subr.mxu0 0.0
  %1304 = vmatpush1.xpose.msra.mxu0 0.0
  %1305 = vmatprep.subr.mxu0 0.0
  %1306 = vmatpush1.xpose.msra.mxu0 0.0
  %1307 = vmatprep.subr.mxu0 0.0
  %1308 = vmatpush1.xpose.msra.mxu0 0.0
  %1309 = vmatprep.subr.mxu0 0.0
  %1310 = vmatpush1.xpose.msra.mxu0 0.0
  %1311 = vmatprep.mubr.f32.mxu0 0.0
  %1312 = vmatmul.mubr.f32.gmra.mrb[0].mxu0 %v1197
  %v1313 = vpop.f32.mrb[0].mxu0
  %v1314 = vadd.f32 %v1193, %v1313
  %v1315 = vpop.f32.mrb[0].mxu0
  %1316 = vdwg.mxu0
  %v1317 = vld [vmem:[#allocation2] sm:$0x1]
  %1319 = vset.pattern.permute.xlu0 0
  %1320 = vperm.xlu0 %1319, %v1317
  %v1321 = vpop.permute.xlu0 %1320
  %v1323 = vlaneseq
  %v1324 = vshrl.u32 %v1323, 7
  %v1325 = vsub.s32 0, %v1324
  %v1326 = vrot.slane %v1321, %v1325
  %v1327 = vadd.f32 %v1314, %v1326
  %1328 = vst [vmem:[%s14] sm:$0x1] %v1327
  // Predicated region
  $region58: #{ncf_forward.1} parent=0 // pred_check
    _
  $region59: #{ncf_forward.1} parent=0 // pred_check_branch
    %1330 = sbr.rel (0) target = $region61
  $region60: #{ncf_forward.1} parent=0 // pred_region
    _
  $region61: #{ncf_forward.1} parent=0 // pred_fallthru
    _
  // Predicated region
  $region62: #{ncf_forward.1} parent=0 // pred_check
    _
  $region63: #{ncf_forward.1} parent=0 // pred_check_branch
    %1332 = sbr.rel (0) target = $region65
  $region64: #{ncf_forward.1} parent=0 // pred_region
    _
  $region65: #{ncf_forward.1} parent=0 // pred_fallthru
    _

</llo_original>
